<compile_context>
chip_gen: v7x
topology: tpu7x:2x2x1
jax: 0.10.0
libtpu: 0.0.40
codegen_flags: <defaults>
</compile_context>

<pallas_src>
import functools

import jax
import jax.numpy as jnp
from jax.experimental import pallas as pl
from jax.experimental.pallas import tpu as pltpu


def _round_up(v, m):
    return ((v + m - 1) // m) * m


@functools.lru_cache(maxsize=None)
def _vmem_limit_bytes():
    """Generation-aware scoped-VMEM limit (leave headroom for compiler scratch)."""
    try:
        cap = int(pltpu.get_tpu_info().vmem_capacity_bytes)
    except Exception:
        cap = 128 * 1024 * 1024
    # v5e/v6e (128 MiB) -> 96 MiB ; v7x (64 MiB) -> 48 MiB.
    return min(96 * 1024 * 1024, (cap * 3) // 4)


# ---------------------------------------------------------------------------
# generic fused  relu(x @ w + b)  kernel (BN scale pre-folded into w columns)
# ---------------------------------------------------------------------------
def _mm_bias_relu_kernel(x_ref, w_ref, b_ref, o_ref):
    y = jnp.dot(x_ref[...], w_ref[...], preferred_element_type=jnp.float32)
    o_ref[...] = jnp.maximum(y + b_ref[...], 0.0).astype(o_ref.dtype)


def _pick_tm(m, k, n):
    """Largest row tile dividing m that fits a VMEM budget; mild >=2-step pref."""
    budget = _vmem_limit_bytes() // 2
    chosen = None
    for t in (4096, 2048, 1024, 512, 256, 128, 64, 32, 16, 8):
        if m % t:
            continue
        # double-buffered activation/output tiles (bf16) + resident weight/bias
        foot = 2 * (t * k + t * n) * 2 + k * n * 2 + 4 * n
        if foot > budget:
            continue
        if chosen is None:
            chosen = t
        # prefer >=2 grid steps (v7x megacore) but never shrink below 512 rows
        if m // t >= 2 or t <= 512:
            return t
    return chosen if chosen is not None else 8


def fused_matmul_bias_relu(x2d, w, bias, out_dtype=jnp.bfloat16):
    """relu(x2d @ w + bias); bf16 MXU operands, f32 accumulate, bf16 out."""
    M, K = x2d.shape
    N = w.shape[1]
    xb = x2d.astype(jnp.bfloat16)
    Mp = _round_up(M, 8)
    if Mp != M:
        xb = jnp.pad(xb, ((0, Mp - M), (0, 0)))
    tm = _pick_tm(Mp, K, N)
    out = pl.pallas_call(
        _mm_bias_relu_kernel,
        out_shape=jax.ShapeDtypeStruct((Mp, N), out_dtype),
        grid=(Mp // tm,),
        in_specs=[
            pl.BlockSpec((tm, K), lambda i: (i, 0)),
            pl.BlockSpec((K, N), lambda i: (0, 0)),
            pl.BlockSpec((1, N), lambda i: (0, 0)),
        ],
        out_specs=pl.BlockSpec((tm, N), lambda i: (i, 0)),
        compiler_params=pltpu.CompilerParams(
            dimension_semantics=("parallel",),
            vmem_limit_bytes=_vmem_limit_bytes()),
    )(xb, w.astype(jnp.bfloat16), bias.reshape(1, N).astype(jnp.float32))
    return out if Mp == M else out[:M]


# ---------------------------------------------------------------------------
# fused ASPP (branches 2..5) + head kernel: one grid step per image.
# Taps are built in VMEM from a single zero-halo'd copy of the image (no
# shifted slabs in HBM); each branch is one big-K MXU dot; the head is one dot.
# ---------------------------------------------------------------------------
def _aspp_head_kernel(H, W, taps_per_dilation, pad_rows, x_ref, w1_ref, *rest):
    nd = len(taps_per_dilation)
    wd_refs = rest[:nd]
    bbr_ref, whead_ref, hb_ref, o_ref = rest[nd:]
    HW = H * W

    x = x_ref[...]                                        # (HW, Cp) bf16
    Cp = x.shape[1]

    if pad_rows > 0:
        halo = jnp.zeros((pad_rows, Cp), x.dtype)
        xpad = jnp.concatenate([halo, x, halo], axis=0)   # zero rows handle y-edges
    else:
        xpad = x

    # per-row column index (x coordinate) for the x-edge validity masks
    col = jax.lax.broadcasted_iota(jnp.int32, (HW, Cp), 0) % W

    # branch conv2 (plain 1x1)
    z_parts = [jnp.dot(x, w1_ref[...], preferred_element_type=jnp.float32)]

    # dilated 3x3 branches: lane-concat the kept taps, one K = n_taps*Cp dot each
    for di, taps in enumerate(taps_per_dilation):
        patches = []
        for (dy, dx) in taps:
            if dy == 0 and dx == 0:
                patch = x
            else:
                s = dy * W + dx
                patch = xpad[pad_rows + s:pad_rows + s + HW, :]
                if dx != 0:
                    valid = jnp.logical_and(col + dx >= 0, col + dx < W)
                    patch = jnp.where(valid, patch, jnp.zeros_like(patch))
            patches.append(patch)
        pm = patches[0] if len(patches) == 1 else jnp.concatenate(patches, axis=1)
        z_parts.append(jnp.dot(pm, wd_refs[di][...],
                               preferred_element_type=jnp.float32))

    # branch biases + ReLU, then ONE head matmul over the lane-concat of branches
    z = jnp.concatenate(z_parts, axis=1)                  # (HW, (nd+1)*innerp) f32
    a = jnp.maximum(z + bbr_ref[...], 0.0).astype(jnp.bfloat16)
    y = jnp.dot(a, whead_ref[...], preferred_element_type=jnp.float32)
    # head BN bias + folded GAP-branch contribution (per image) + head ReLU
    o_ref[...] = jnp.maximum(y + hb_ref[...], 0.0).astype(o_ref.dtype)


# --------------------------- parameters / folding ---------------------------
def make_conv_bn(key, cin, cout, ksize=1, conv_bias=False):
    ks = jax.random.split(key, 6)
    return {
        "w": jax.random.normal(ks[0], (ksize, ksize, cin, cout), jnp.float32) * 0.05,
        "cb": (jax.random.normal(ks[1], (cout,), jnp.float32) * 0.05
               if conv_bias else None),
        "gamma": 0.5 + 0.5 * jax.random.uniform(ks[2], (cout,), jnp.float32),
        "beta": jax.random.normal(ks[3], (cout,), jnp.float32) * 0.05,
        "mean": jax.random.normal(ks[4], (cout,), jnp.float32) * 0.05,
        "var": 0.5 + 0.5 * jax.random.uniform(ks[5], (cout,), jnp.float32),
    }


def bn_fold(p, eps=1e-5):
    s = p["gamma"] / jnp.sqrt(p["var"] + eps)
    b = p["beta"] - p["mean"] * s
    if p["cb"] is not None:
        b = b + p["cb"] * s
    return s, b


def fold_scale_into_w(p):
    s, b = bn_fold(p)
    return p["w"] * s, b        # s broadcasts over the trailing (cout) axis


def build_params(key, in_planes, inner_planes, low_conv_planes):
    ks = jax.random.split(key, 7)
    return {
        "low_conv": make_conv_bn(ks[0], 256, low_conv_planes, 1, conv_bias=True),
        "aspp_conv1": make_conv_bn(ks[1], in_planes, inner_planes, 1),
        "aspp_conv2": make_conv_bn(ks[2], in_planes, inner_planes, 1),
        "aspp_conv3": make_conv_bn(ks[3], in_planes, inner_planes, 3),
        "aspp_conv4": make_conv_bn(ks[4], in_planes, inner_planes, 3),
        "aspp_conv5": make_conv_bn(ks[5], in_planes, inner_planes, 3),
        "head": make_conv_bn(ks[6], 5 * inner_planes, 256, 1),
    }


# ------------------------------ layer wrappers ------------------------------
def apply_low_conv(p, x_nhwc):
    """1x1 conv + BN + ReLU with a lane-dense (padded-to-128) bf16 output."""
    B, H, W, C = x_nhwc.shape
    s, b = bn_fold(p)
    w = p["w"].reshape(C, -1) * s[None, :]
    cout = w.shape[1]
    n_pad = _round_up(cout, 128)
    w = jnp.pad(w, ((0, 0), (0, n_pad - cout)))
    b = jnp.pad(b, ((0, n_pad - cout),))
    y = fused_matmul_bias_relu(x_nhwc.reshape(-1, C), w, b)
    # padded lanes hold relu(0)=0; the slice fuses into the downstream concat.
    return y.reshape(B, H, W, n_pad)[..., :cout]


def apply_aspp_head(params, x4_nhwc, dilations):
    """ASPP (all 5 branches) + head 1x1 conv in a single Pallas kernel."""
    B, H, W, C = x4_nhwc.shape
    nd = len(dilations)
    inner = params["aspp_conv2"]["w"].shape[-1]
    n_out = params["head"]["w"].shape[-1]
    HW = H * W
    Cp = _round_up(C, 128)
    innerp = _round_up(inner, 128)

    # ---- statically prune taps that can never touch real data ---------------
    taps_per_dilation = []
    for d in dilations:
        kept = []
        for ky in range(3):
            for kx in range(3):
                dy, dx = (ky - 1) * d, (kx - 1) * d
                if abs(dy) < H and abs(dx) < W:   # otherwise contribution == 0
                    kept.append((dy, dx, ky, kx))
        taps_per_dilation.append(tuple(kept))
    pad_rows = 0
    for kept in taps_per_dilation:
        for (dy, dx, _, _) in kept:
            pad_rows = max(pad_rows, abs(dy * W + dx))
    pad_rows = _round_up(pad_rows, 8)

    # ---- BN-folded, channel-padded branch weights (bf16) ---------------------
    w2, b2 = fold_scale_into_w(params["aspp_conv2"])            # (1,1,C,inner)
    w2p = jnp.pad(w2.reshape(C, inner), ((0, Cp - C), (0, innerp - inner)))
    b2p = jnp.pad(b2, (0, innerp - inner))

    dil_keys = ("aspp_conv3", "aspp_conv4", "aspp_conv5")
    wd_list, bd_list = [], []
    for di in range(nd):
        w, b = fold_scale_into_w(params[dil_keys[di]])          # (3,3,C,inner)
        w = jnp.pad(w, ((0, 0), (0, 0), (0, Cp - C), (0, innerp - inner)))
        blocks = [w[ky, kx] for (_, _, ky, kx) in taps_per_dilation[di]]
        wd_list.append(jnp.concatenate(blocks, axis=0).astype(jnp.bfloat16))
        bd_list.append(jnp.pad(b, (0, innerp - inner)))

    bbr = jnp.concatenate([b2p] + bd_list).reshape(
        1, (nd + 1) * innerp).astype(jnp.float32)

    wh, bh = fold_scale_into_w(params["head"])                  # (1,1,5*inner,256)
    wh = wh.reshape((nd + 2) * inner, n_out)
    wh_gap = wh[:inner]                                         # GAP-branch block
    wh_rest = wh[inner:].reshape(nd + 1, inner, n_out)
    wh_rest = jnp.pad(wh_rest, ((0, 0), (0, innerp - inner), (0, 0)))
    whead = wh_rest.reshape((nd + 1) * innerp, n_out).astype(jnp.bfloat16)

    # ---- GAP branch folded (through its head block) into a per-image head bias
    w1, b1 = fold_scale_into_w(params["aspp_conv1"])
    pooled = jnp.mean(x4_nhwc, axis=(1, 2))                     # (B, C) f32
    z1 = jnp.maximum(pooled @ w1.reshape(C, inner) + b1, 0.0)   # (B, inner)
    head_bias = (bh[None, :] + z1 @ wh_gap).reshape(B, 1, n_out).astype(jnp.float32)

    # ---- input: ONE lane-padded bf16 copy (no shifted slabs in HBM) ----------
    xb = jnp.pad(x4_nhwc.astype(jnp.bfloat16),
                 ((0, 0), (0, 0), (0, 0), (0, Cp - C))).reshape(B, HW, Cp)

    taps_static = tuple(tuple((dy, dx) for (dy, dx, _, _) in kept)
                        for kept in taps_per_dilation)
    kernel = functools.partial(_aspp_head_kernel, H, W, taps_static, pad_rows)

    in_specs = [pl.BlockSpec((None, HW, Cp), lambda b: (b, 0, 0)),
                pl.BlockSpec((Cp, innerp), lambda b: (0, 0))]
    for kept in taps_per_dilation:
        nk = len(kept)
        in_specs.append(pl.BlockSpec((nk * Cp, innerp), lambda b: (0, 0)))
    in_specs += [pl.BlockSpec((1, (nd + 1) * innerp), lambda b: (0, 0)),
                 pl.BlockSpec(((nd + 1) * innerp, n_out), lambda b: (0, 0)),
                 pl.BlockSpec((None, 1, n_out), lambda b: (b, 0, 0))]

    out = pl.pallas_call(
        kernel,
        out_shape=jax.ShapeDtypeStruct((B, HW, n_out), jnp.bfloat16),
        grid=(B,),
        in_specs=in_specs,
        out_specs=pl.BlockSpec((None, HW, n_out), lambda b: (b, 0, 0)),
        compiler_params=pltpu.CompilerParams(
            dimension_semantics=("parallel",),
            vmem_limit_bytes=_vmem_limit_bytes()),
    )(xb, w2p.astype(jnp.bfloat16), *wd_list, bbr, whead, head_bias)
    return out.reshape(B, H, W, n_out)


# --------------------------- bilinear (align_corners) -----------------------
def _interp_matrix(n_out, n_in):
    if n_in == 1:
        return jnp.ones((n_out, 1), jnp.float32)
    if n_out == 1:
        pos = jnp.zeros((1,), jnp.float32)
    else:
        pos = jnp.arange(n_out, dtype=jnp.float32) * (n_in - 1) / (n_out - 1)
    lo = jnp.clip(jnp.floor(pos).astype(jnp.int32), 0, n_in - 1)
    hi = jnp.clip(lo + 1, 0, n_in - 1)
    frac = pos - lo.astype(jnp.float32)
    m = jnp.zeros((n_out, n_in), jnp.float32)
    m = m.at[jnp.arange(n_out), lo].add(1.0 - frac)
    m = m.at[jnp.arange(n_out), hi].add(frac)
    return m


def bilinear_resize_align_corners(x_nhwc, out_h, out_w):
    """Two single-contraction matmuls (height then width); bf16 traffic."""
    _, H, W, _ = x_nhwc.shape
    mh = _interp_matrix(out_h, H)
    mw = _interp_matrix(out_w, W)
    y = jnp.einsum("hH,bHWc->bhWc", mh, x_nhwc).astype(x_nhwc.dtype)
    y = jnp.einsum("wW,bhWc->bhwc", mw, y).astype(x_nhwc.dtype)
    return y


# ------------------------------- full forward -------------------------------
def dec_deeplabv3_plus_forward(params, x, deterministic_memory, latent_memory,
                               dilations=(12, 24, 36)):
    x1, _x2, _x3, x4 = x                       # NCHW inputs, like PyTorch
    x1 = jnp.transpose(x1, (0, 2, 3, 1))       # -> NHWC
    x4 = jnp.transpose(x4, (0, 2, 3, 1))

    low_feat = apply_low_conv(params["low_conv"], x1)           # (B, h, w, low) bf16
    h, w = low_feat.shape[1], low_feat.shape[2]

    head_feat = apply_aspp_head(params, x4, dilations)          # (B, H4, W4, 256) bf16
    head_up = bilinear_resize_align_corners(head_feat, h, w)    # (B, h, w, 256) bf16

    fused = jnp.concatenate([low_feat, head_up], axis=-1)
    fused = jnp.transpose(fused, (0, 3, 1, 2)).astype(jnp.float32)   # -> NCHW f32
    # TODO(synk): self.classifier1 = NP_HEAD(...) has no definition in the provided
    # source, so the probabilistic head cannot be reproduced; return the fused
    # decoder feature and pass the memories through unchanged.
    return fused, deterministic_memory, latent_memory


# ----------------------------------- main -----------------------------------
if __name__ == "__main__":
    key = jax.random.PRNGKey(0)
    B = 2
    in_planes = 32          # channels of x4 (ASPP input)
    inner_planes = 32
    low_conv_planes = 16

    k_in, k_par = jax.random.split(key)
    ks = jax.random.split(k_in, 4)
    # x4 spatial 16x16 with dilation 12 < 16 so the real (masked) tap path runs;
    # dilations 24/36 exercise the static tap-pruning path.
    x1 = jax.random.normal(ks[0], (B, 256, 32, 32), jnp.float32)  # low_conv expects 256 ch
    x2 = jax.random.normal(ks[1], (B, 64, 16, 16), jnp.float32)   # unused by forward
    x3 = jax.random.normal(ks[2], (B, 128, 16, 16), jnp.float32)  # unused by forward
    x4 = jax.random.normal(ks[3], (B, in_planes, 16, 16), jnp.float32)
    deterministic_memory = jnp.zeros((5, 64), jnp.float32)
    latent_memory = jnp.zeros((5, 64), jnp.float32)

    params = build_params(k_par, in_planes, inner_planes, low_conv_planes)

    fused, dm, lm = dec_deeplabv3_plus_forward(
        params, (x1, x2, x3, x4), deterministic_memory, latent_memory)
    jax.block_until_ready(fused)

    assert fused.shape == (B, low_conv_planes + 256, 32, 32), fused.shape
    print("KERNEL_OK")
</pallas_src>

<mosaic_0001>
module attributes {stable_mosaic.version = 11 : i64} {
  func.func @_mm_bias_relu_kernel(%arg0: i32, %arg1: memref<1024x256xbf16, #tpu.memory_space<vmem>>, %arg2: memref<256x128xbf16, #tpu.memory_space<vmem>>, %arg3: memref<1x128xf32, #tpu.memory_space<vmem>>, %arg4: memref<1024x128xbf16, #tpu.memory_space<vmem>>) attributes {dimension_semantics = [#tpu.dimension_semantics<parallel>], iteration_bounds = array<i64: 2>, scalar_prefetch = 0 : i64, scratch_operands = 0 : i64, tpu.core_type = #tpu.core_type<tc>, window_params = [{transform_indices = @transform_0, window_bounds = array<i64: 1024, 256>}, {pipeline_mode = #tpu.pipeline_mode<synchronous>, transform_indices = @transform_1, window_bounds = array<i64: 256, 128>}, {pipeline_mode = #tpu.pipeline_mode<synchronous>, transform_indices = @transform_2, window_bounds = array<i64: 1, 128>}, {transform_indices = @transform_3, window_bounds = array<i64: 1024, 128>}]} {
    %c0 = arith.constant 0 : index
    %c0_0 = arith.constant 0 : index
    %0 = vector.load %arg1[%c0, %c0_0] : memref<1024x256xbf16, #tpu.memory_space<vmem>>, vector<1024x256xbf16>
    %c0_1 = arith.constant 0 : index
    %c0_2 = arith.constant 0 : index
    %1 = vector.load %arg2[%c0_1, %c0_2] : memref<256x128xbf16, #tpu.memory_space<vmem>>, vector<256x128xbf16>
    %cst = arith.constant dense<0.000000e+00> : vector<1024x128xf32>
    %2 = tpu.matmul %0, %1, %cst {dimension_numbers = #tpu.dot_dimension_numbers<[1], [0], [0], [1], [0, 0, 1, 1], [], []>} : vector<1024x256xbf16>, vector<256x128xbf16>, vector<1024x128xf32> -> vector<1024x128xf32>
    %c0_3 = arith.constant 0 : index
    %c0_4 = arith.constant 0 : index
    %3 = vector.load %arg3[%c0_3, %c0_4] : memref<1x128xf32, #tpu.memory_space<vmem>>, vector<1x128xf32>
    %4 = vector.broadcast %3 : vector<1x128xf32> to vector<1024x128xf32>
    %5 = arith.addf %2, %4 : vector<1024x128xf32>
    %cst_5 = arith.constant 0.000000e+00 : f32
    %6 = vector.broadcast %cst_5 : f32 to vector<1024x128xf32>
    %7 = arith.maximumf %5, %6 : vector<1024x128xf32>
    %8 = arith.truncf %7 : vector<1024x128xf32> to vector<1024x128xbf16>
    %c0_6 = arith.constant 0 : index
    %c0_7 = arith.constant 0 : index
    %9 = vector.load %arg4[%c0_6, %c0_7] : memref<1024x128xbf16, #tpu.memory_space<vmem>>, vector<1024x128xbf16>
    tpu.vector_store %arg4[%c0_6, %c0_7], %8 {strides = array<i32>} : memref<1024x128xbf16, #tpu.memory_space<vmem>>, vector<1024x128xbf16>,
    return
  }
  func.func @transform_0(%arg0: i32) -> (i32, i32) {
    %c0_i32 = arith.constant 0 : i32
    %c0_i32_0 = arith.constant 0 : i32
    return %arg0, %c0_i32 : i32, i32
  }
  func.func @transform_1(%arg0: i32) -> (i32, i32) {
    %c0_i32 = arith.constant 0 : i32
    %c0_i32_0 = arith.constant 0 : i32
    %c0_i32_1 = arith.constant 0 : i32
    return %c0_i32, %c0_i32_0 : i32, i32
  }
  func.func @transform_2(%arg0: i32) -> (i32, i32) {
    %c0_i32 = arith.constant 0 : i32
    %c0_i32_0 = arith.constant 0 : i32
    %c0_i32_1 = arith.constant 0 : i32
    return %c0_i32, %c0_i32_0 : i32, i32
  }
  func.func @transform_3(%arg0: i32) -> (i32, i32) {
    %c0_i32 = arith.constant 0 : i32
    %c0_i32_0 = arith.constant 0 : i32
    return %arg0, %c0_i32 : i32, i32
  }
}

</mosaic_0001>

<llo_original>
// kernel: tpu_custom_call.1
$region0: #{tpu_custom_call.1}
  #allocation0 [shape = 'u32[]', space=smem, size = 0x4, offset = 0x4, fixed_abs, tag = 'smem constant byte address 0x4 - core index']
  #allocation1 [shape = 'u32[144,128]{1,0:T(1,128)}', space=vmem, size = 0x12000, scoped, tag = 'internal scratch']
  %s0 = inlined_call_operand.hbm [shape: bf16[2048,256], index: 0, kind: input, shape index: {}]
  %s1 = inlined_call_operand.hbm [shape: bf16[256,128], index: 1, kind: input, shape index: {}]
  %s2 = inlined_call_operand.hbm [shape: f32[1,128], index: 2, kind: input, shape index: {}]
  %s3 = inlined_call_operand.hbm [shape: bf16[2048,128], index: 3, kind: output, shape index: {}]
  %s4 = sld [smem:[#allocation0]]
  $region57: #{tpu_custom_call.1} parent=0
    _
  %s6 = ssub.s32 1, %s4
  %s7 = scalar_select 0, %s6, %s4
  $region1: #{tpu_custom_call.1} parent=0
    #allocation2 [shape = 'u8[1048576]{0}', space=vmem, size = 0x100000, scoped, tag = 'input window, operand 0']
    #allocation3 [shape = 's32[2]{0}', space=sflag, size = 0x8, scoped, tag = 'scoped memory for tpu_custom_call.1']
    #allocation4 [shape = 's32[2]{0}', space=sflag, size = 0x8, scoped, tag = 'scoped memory for tpu_custom_call.1']
    #allocation5 [shape = 'u8[65536]{0}', space=vmem, size = 0x10000, scoped, tag = 'input window, operand 1, single buffered']
    #allocation6 [shape = 's32[1]{0}', space=sflag, size = 0x4, scoped, tag = 'scoped memory for tpu_custom_call.1']
    #allocation7 [shape = 'u8[512]{0}', space=vmem, size = 0x400, scoped, tag = 'input window, operand 2, single buffered']
    #allocation8 [shape = 'u8[524288]{0}', space=vmem, size = 0x80000, scoped, tag = 'output window, operand 0']
    %8 = vsyncpa [#allocation3], 0
    %s9 = scalar_lea.sflag [#allocation3], 1
    %10 = vsyncpa %s9, 0
    %11 = vsyncpa [#allocation6], 0
    %12 = vsyncpa [#allocation4], 0
    %s13 = scalar_lea.sflag [#allocation4], 1
    %14 = vsyncpa %s13, 0
    loop: start=0, step=1, limit=4
    $region2: #{tpu_custom_call.1} parent=1 // loop_pre_header
      _
    $region3: #{tpu_custom_call.1} parent=1 // loop_header
      %s16 = sphi 0, %s20
      %p17 = scmp.ge.s32.totalorder %s16, 4
      %s26 = sphi 0, %s28
      %s29 = sphi 0, %s26
      %s30 = sphi 0, %s29
      %s46 = sphi 0, %s30
      %s50 = sphi 0, %s50
      %s52 = sphi 0, %s50
      %s53 = sphi 0, %s52
      %s67 = sphi 0, %s53
      %s71 = sphi 0, %s71
      %s73 = sphi 0, %s71
      %s74 = sphi 0, %s73
      %s88 = sphi 0, %s74
      %s94 = sphi 0, %s96
      %s97 = sphi 0, %s94
      %s98 = sphi 0, %s97
      %s114 = sphi 0, %s98
    $region4: #{tpu_custom_call.1} parent=1 // loop_header_branch
      %19 = sbr.rel (%p17) target = $region8
    $region5: #{tpu_custom_call.1} parent=1 // loop_body
      %s21 = ssub.s32 %s16, 1
      %s22 = ssub.s32 %s16, 2
      %s23 = sadd.s32 %s16, 1
      %s24 = ssub.s32 %s16, %s23
      %p25 = scmp.eq.s32.totalorder %s24, 0
      %s27 = sadd.s32 %s26, 1
      %s28 = scalar_select %p25, %s26, %s27
      %p31 = pneg %p25
      %p32 = scmp.eq.s32.totalorder %s16, 1
      %p33 = por %p31, %p32
      %p34 = scmp.ne.s32.totalorder %s26, %s29
      %p35 = scmp.eq.s32.totalorder %s16, 0
      %p36 = por %p34, %p35
      %p37 = scmp.ne.s32.totalorder %s26, %s29
      %p38 = scmp.eq.s32.totalorder %s21, 1
      %p39 = por %p37, %p38
      %p40 = scmp.ne.s32.totalorder %s29, %s30
      %p41 = scmp.eq.s32.totalorder %s21, 0
      %p42 = por %p40, %p41
      %p43 = scmp.ne.s32.totalorder %s29, %s30
      %p44 = scmp.eq.s32.totalorder %s22, 1
      %p45 = por %p43, %p44
      %p47 = scmp.ne.s32.totalorder %s30, %s46
      %p48 = scmp.eq.s32.totalorder %s22, 0
      %p49 = por %p47, %p48
      %s51 = sadd.s32 %s50, 1
      %p54 = scmp.eq.s32.totalorder %s16, 1
      %p55 = scmp.ne.s32.totalorder %s50, %s52
      %p56 = scmp.eq.s32.totalorder %s16, 0
      %p57 = por %p55, %p56
      %p58 = scmp.ne.s32.totalorder %s50, %s52
      %p59 = scmp.eq.s32.totalorder %s21, 1
      %p60 = por %p58, %p59
      %p61 = scmp.ne.s32.totalorder %s52, %s53
      %p62 = scmp.eq.s32.totalorder %s21, 0
      %p63 = por %p61, %p62
      %p64 = scmp.ne.s32.totalorder %s52, %s53
      %p65 = scmp.eq.s32.totalorder %s22, 1
      %p66 = por %p64, %p65
      %p68 = scmp.ne.s32.totalorder %s53, %s67
      %p69 = scmp.eq.s32.totalorder %s22, 0
      %p70 = por %p68, %p69
      %s72 = sadd.s32 %s71, 1
      %p75 = scmp.eq.s32.totalorder %s16, 1
      %p76 = scmp.ne.s32.totalorder %s71, %s73
      %p77 = scmp.eq.s32.totalorder %s16, 0
      %p78 = por %p76, %p77
      %p79 = scmp.ne.s32.totalorder %s71, %s73
      %p80 = scmp.eq.s32.totalorder %s21, 1
      %p81 = por %p79, %p80
      %p82 = scmp.ne.s32.totalorder %s73, %s74
      %p83 = scmp.eq.s32.totalorder %s21, 0
      %p84 = por %p82, %p83
      %p85 = scmp.ne.s32.totalorder %s73, %s74
      %p86 = scmp.eq.s32.totalorder %s22, 1
      %p87 = por %p85, %p86
      %p89 = scmp.ne.s32.totalorder %s74, %s88
      %p90 = scmp.eq.s32.totalorder %s22, 0
      %p91 = por %p89, %p90
      %s92 = ssub.s32 %s16, %s23
      %p93 = scmp.eq.s32.totalorder %s92, 0
      %s95 = sadd.s32 %s94, 1
      %s96 = scalar_select %p93, %s94, %s95
      %p99 = pneg %p93
      %p100 = scmp.eq.s32.totalorder %s16, 1
      %p101 = por %p99, %p100
      %p102 = scmp.ne.s32.totalorder %s94, %s97
      %p103 = scmp.eq.s32.totalorder %s16, 0
      %p104 = por %p102, %p103
      %p105 = scmp.ne.s32.totalorder %s94, %s97
      %p106 = scmp.eq.s32.totalorder %s21, 1
      %p107 = por %p105, %p106
      %p108 = scmp.ne.s32.totalorder %s97, %s98
      %p109 = scmp.eq.s32.totalorder %s21, 0
      %p110 = por %p108, %p109
      %p111 = scmp.ne.s32.totalorder %s97, %s98
      %p112 = scmp.eq.s32.totalorder %s22, 1
      %p113 = por %p111, %p112
      %p115 = scmp.ne.s32.totalorder %s98, %s114
      %p116 = scmp.eq.s32.totalorder %s22, 0
      %p117 = por %p115, %p116
      %p118 = scmp.le.s32.totalorder 1, %s16
      %p119 = scmp.lt.s32.totalorder %s16, 3
      %p120 = pnand %p118, %p119
      %p121 = pneg %p120
      // Predicated region
      $region9: #{tpu_custom_call.1} parent=5 // pred_check
        _
      $region10: #{tpu_custom_call.1} parent=5 // pred_check_branch
        %123 = sbr.rel (%p120) target = $region12
      $region11: #{tpu_custom_call.1} parent=5 // pred_region
        %s124 = ssub.s32 %s16, 1
        // Predicated region
        $region13: #{tpu_custom_call.1} parent=11 // pred_check
          %p125 = pneg %p63
        $region14: #{tpu_custom_call.1} parent=11 // pred_check_branch
          %127 = sbr.rel (%p125) target = $region16
        $region15: #{tpu_custom_call.1} parent=11 // pred_region
          %s129 = ssub.s32 2048, 2048
          %130 = vsyncadd [#allocation6], %s129
          %s131 = sshll.u32 [#allocation5], 4
          %s132 = int_to_ptr.vmem [resolvable:$true] %s131
          %137 = dma.hbm_to_vmem [thread:$0]  %s1, 2048, %s132, [#allocation6], 64, 64, 4
        $region16: #{tpu_custom_call.1} parent=11 // pred_fallthru
          _
        // Predicated region
        $region17: #{tpu_custom_call.1} parent=11 // pred_check
          %p138 = pneg %p84
        $region18: #{tpu_custom_call.1} parent=11 // pred_check_branch
          %140 = sbr.rel (%p138) target = $region20
        $region19: #{tpu_custom_call.1} parent=11 // pred_region
          %s142 = ssub.s32 16, 16
          %143 = vsyncadd [#allocation6], %s142
          %s145 = sshll.u32 [#allocation7], 4
          %s146 = int_to_ptr.vmem [resolvable:$true] %s145
          %148 = dma.hbm_to_vmem [thread:$0]  %s2, 16, %s146, [#allocation6]
        $region20: #{tpu_custom_call.1} parent=11 // pred_fallthru
          _
      $region12: #{tpu_custom_call.1} parent=5 // pred_fallthru
        _
      %p149 = scmp.lt.s32.totalorder %s16, 2
      // Predicated region
      $region21: #{tpu_custom_call.1} parent=5 // pred_check
        %p150 = pneg %p149
      $region22: #{tpu_custom_call.1} parent=5 // pred_check_branch
        %152 = sbr.rel (%p150) target = $region24
      $region23: #{tpu_custom_call.1} parent=5 // pred_region
        // Predicated region
        $region25: #{tpu_custom_call.1} parent=23 // pred_check
          %p153 = pneg %p36
        $region26: #{tpu_custom_call.1} parent=23 // pred_check_branch
          %155 = sbr.rel (%p153) target = $region28
        $region27: #{tpu_custom_call.1} parent=23 // pred_region
          %s156 = sand.u32 %s26, 1
          %s157 = scalar_lea.sflag [#allocation3], %s156
          %s158 = sand.u32 %s26, 1
          %s159 = smul.addr %s158, 1024
          %s160 = scalar_lea.vmem [#allocation2], %s159
          %s161 = smul.u32 128, %s16
          %s163 = ssub.s32 16384, 16384
          %164 = vsyncadd %s157, %s163
          %s165 = smul.addr %s161, 2
          %s166 = smul.addr %s165, 64
          %s167 = scalar_lea.hbm %s0, %s166
          %s168 = sshll.u32 %s160, 4
          %s169 = int_to_ptr.vmem [resolvable:$true] %s168
          %174 = dma.hbm_to_vmem [thread:$0]  %s167, 16384, %s169, %s157, 128, 128, 8
        $region28: #{tpu_custom_call.1} parent=23 // pred_fallthru
          _
      $region24: #{tpu_custom_call.1} parent=5 // pred_fallthru
        _
      %p175 = scmp.le.s32.totalorder 1, %s16
      %p176 = scmp.lt.s32.totalorder %s16, 3
      %p177 = pnand %p175, %p176
      %p178 = pneg %p177
      // Predicated region
      $region29: #{tpu_custom_call.1} parent=5 // pred_check
        _
      $region30: #{tpu_custom_call.1} parent=5 // pred_check_branch
        %180 = sbr.rel (%p177) target = $region32
      $region31: #{tpu_custom_call.1} parent=5 // pred_region
        %s181 = ssub.s32 %s16, 1
        %s182 = sand.u32 %s29, 1
        %s183 = scalar_lea.sflag [#allocation3], %s182
        %s184 = sand.u32 %s29, 1
        %s185 = smul.addr %s184, 1024
        %s186 = scalar_lea.vmem [#allocation2], %s185
        // Predicated region
        $region33: #{tpu_custom_call.1} parent=31 // pred_check
          %p187 = pneg %p42
        $region34: #{tpu_custom_call.1} parent=31 // pred_check_branch
          %189 = sbr.rel (%p187) target = $region36
        $region35: #{tpu_custom_call.1} parent=31 // pred_region
          %190 = dma.done %s183, 16384
        $region36: #{tpu_custom_call.1} parent=31 // pred_fallthru
          _
        // Predicated region
        $region37: #{tpu_custom_call.1} parent=31 // pred_check
          %p191 = pneg %p63
        $region38: #{tpu_custom_call.1} parent=31 // pred_check_branch
          %193 = sbr.rel (%p191) target = $region40
        $region39: #{tpu_custom_call.1} parent=31 // pred_region
          %194 = dma.done [#allocation6], 2048
        $region40: #{tpu_custom_call.1} parent=31 // pred_fallthru
          _
        // Predicated region
        $region41: #{tpu_custom_call.1} parent=31 // pred_check
          %p195 = pneg %p84
        $region42: #{tpu_custom_call.1} parent=31 // pred_check_branch
          %197 = sbr.rel (%p195) target = $region44
        $region43: #{tpu_custom_call.1} parent=31 // pred_region
          %198 = dma.done [#allocation6], 16
        $region44: #{tpu_custom_call.1} parent=31 // pred_fallthru
          _
        %s199 = sand.u32 %s29, 1
        %s200 = scalar_lea.sflag [#allocation3], %s199
        %s201 = sand.u32 %s29, 1
        %s202 = smul.addr %s201, 1024
        %s203 = scalar_lea.vmem [#allocation2], %s202
        %p204 = pneg %p42
        %p205 = pneg %p39
        %p206 = pneg %p63
        %p207 = pneg %p60
        %p208 = pneg %p84
        %p209 = pneg %p81
        %p210 = pneg %p110
        %p211 = pneg %p107
        %s212 = sand.u32 %s97, 1
        %s213 = scalar_lea.sflag [#allocation4], %s212
        %s214 = sand.u32 %s97, 1
        %s215 = smul.addr %s214, 512
        %s216 = scalar_lea.vmem [#allocation8], %s215
        %s217 = smul.u32 128, %s21
        %s218 = smul.u32 128, %s21
        %v220 = vld [vmem:[%s186] sm:$0xff]
        %v221 = vld [vmem:[%s186 + $0x8] sm:$0xff]
        %v222 = vld [vmem:[%s186 + $0x10] sm:$0xff]
        %v223 = vld [vmem:[%s186 + $0x18] sm:$0xff]
        %v224 = vld [vmem:[%s186 + $0x20] sm:$0xff]
        %v225 = vld [vmem:[%s186 + $0x28] sm:$0xff]
        %v226 = vld [vmem:[%s186 + $0x30] sm:$0xff]
        %v227 = vld [vmem:[%s186 + $0x38] sm:$0xff]
        %v228 = vld [vmem:[%s186 + $0x40] sm:$0xff]
        %v229 = vld [vmem:[%s186 + $0x48] sm:$0xff]
        %v230 = vld [vmem:[%s186 + $0x50] sm:$0xff]
        %v231 = vld [vmem:[%s186 + $0x58] sm:$0xff]
        %v232 = vld [vmem:[%s186 + $0x60] sm:$0xff]
        %v233 = vld [vmem:[%s186 + $0x68] sm:$0xff]
        %v234 = vld [vmem:[%s186 + $0x70] sm:$0xff]
        %v235 = vld [vmem:[%s186 + $0x78] sm:$0xff]
        %v236 = vld [vmem:[%s186 + $0x80] sm:$0xff]
        %v237 = vld [vmem:[%s186 + $0x88] sm:$0xff]
        %v238 = vld [vmem:[%s186 + $0x90] sm:$0xff]
        %v239 = vld [vmem:[%s186 + $0x98] sm:$0xff]
        %v240 = vld [vmem:[%s186 + $0xa0] sm:$0xff]
        %v241 = vld [vmem:[%s186 + $0xa8] sm:$0xff]
        %v242 = vld [vmem:[%s186 + $0xb0] sm:$0xff]
        %v243 = vld [vmem:[%s186 + $0xb8] sm:$0xff]
        %v244 = vld [vmem:[%s186 + $0xc0] sm:$0xff]
        %v245 = vld [vmem:[%s186 + $0xc8] sm:$0xff]
        %v246 = vld [vmem:[%s186 + $0xd0] sm:$0xff]
        %v247 = vld [vmem:[%s186 + $0xd8] sm:$0xff]
        %v248 = vld [vmem:[%s186 + $0xe0] sm:$0xff]
        %v249 = vld [vmem:[%s186 + $0xe8] sm:$0xff]
        %v250 = vld [vmem:[%s186 + $0xf0] sm:$0xff]
        %v251 = vld [vmem:[%s186 + $0xf8] sm:$0xff]
        %v252 = vld [vmem:[%s186 + $0x100] sm:$0xff]
        %v253 = vld [vmem:[%s186 + $0x108] sm:$0xff]
        %v254 = vld [vmem:[%s186 + $0x110] sm:$0xff]
        %v255 = vld [vmem:[%s186 + $0x118] sm:$0xff]
        %v256 = vld [vmem:[%s186 + $0x120] sm:$0xff]
        %v257 = vld [vmem:[%s186 + $0x128] sm:$0xff]
        %v258 = vld [vmem:[%s186 + $0x130] sm:$0xff]
        %v259 = vld [vmem:[%s186 + $0x138] sm:$0xff]
        %v260 = vld [vmem:[%s186 + $0x140] sm:$0xff]
        %v261 = vld [vmem:[%s186 + $0x148] sm:$0xff]
        %v262 = vld [vmem:[%s186 + $0x150] sm:$0xff]
        %v263 = vld [vmem:[%s186 + $0x158] sm:$0xff]
        %v264 = vld [vmem:[%s186 + $0x160] sm:$0xff]
        %v265 = vld [vmem:[%s186 + $0x168] sm:$0xff]
        %v266 = vld [vmem:[%s186 + $0x170] sm:$0xff]
        %v267 = vld [vmem:[%s186 + $0x178] sm:$0xff]
        %v268 = vld [vmem:[%s186 + $0x180] sm:$0xff]
        %v269 = vld [vmem:[%s186 + $0x188] sm:$0xff]
        %v270 = vld [vmem:[%s186 + $0x190] sm:$0xff]
        %v271 = vld [vmem:[%s186 + $0x198] sm:$0xff]
        %v272 = vld [vmem:[%s186 + $0x1a0] sm:$0xff]
        %v273 = vld [vmem:[%s186 + $0x1a8] sm:$0xff]
        %v274 = vld [vmem:[%s186 + $0x1b0] sm:$0xff]
        %v275 = vld [vmem:[%s186 + $0x1b8] sm:$0xff]
        %v276 = vld [vmem:[%s186 + $0x1c0] sm:$0xff]
        %v277 = vld [vmem:[%s186 + $0x1c8] sm:$0xff]
        %v278 = vld [vmem:[%s186 + $0x1d0] sm:$0xff]
        %v279 = vld [vmem:[%s186 + $0x1d8] sm:$0xff]
        %v280 = vld [vmem:[%s186 + $0x1e0] sm:$0xff]
        %v281 = vld [vmem:[%s186 + $0x1e8] sm:$0xff]
        %v282 = vld [vmem:[%s186 + $0x1f0] sm:$0xff]
        %v283 = vld [vmem:[%s186 + $0x1f8] sm:$0xff]
        %v284 = vld [vmem:[%s186 + $0x200] sm:$0xff]
        %v285 = vld [vmem:[%s186 + $0x208] sm:$0xff]
        %v286 = vld [vmem:[%s186 + $0x210] sm:$0xff]
        %v287 = vld [vmem:[%s186 + $0x218] sm:$0xff]
        %v288 = vld [vmem:[%s186 + $0x220] sm:$0xff]
        %v289 = vld [vmem:[%s186 + $0x228] sm:$0xff]
        %v290 = vld [vmem:[%s186 + $0x230] sm:$0xff]
        %v291 = vld [vmem:[%s186 + $0x238] sm:$0xff]
        %v292 = vld [vmem:[%s186 + $0x240] sm:$0xff]
        %v293 = vld [vmem:[%s186 + $0x248] sm:$0xff]
        %v294 = vld [vmem:[%s186 + $0x250] sm:$0xff]
        %v295 = vld [vmem:[%s186 + $0x258] sm:$0xff]
        %v296 = vld [vmem:[%s186 + $0x260] sm:$0xff]
        %v297 = vld [vmem:[%s186 + $0x268] sm:$0xff]
        %v298 = vld [vmem:[%s186 + $0x270] sm:$0xff]
        %v299 = vld [vmem:[%s186 + $0x278] sm:$0xff]
        %v300 = vld [vmem:[%s186 + $0x280] sm:$0xff]
        %v301 = vld [vmem:[%s186 + $0x288] sm:$0xff]
        %v302 = vld [vmem:[%s186 + $0x290] sm:$0xff]
        %v303 = vld [vmem:[%s186 + $0x298] sm:$0xff]
        %v304 = vld [vmem:[%s186 + $0x2a0] sm:$0xff]
        %v305 = vld [vmem:[%s186 + $0x2a8] sm:$0xff]
        %v306 = vld [vmem:[%s186 + $0x2b0] sm:$0xff]
        %v307 = vld [vmem:[%s186 + $0x2b8] sm:$0xff]
        %v308 = vld [vmem:[%s186 + $0x2c0] sm:$0xff]
        %v309 = vld [vmem:[%s186 + $0x2c8] sm:$0xff]
        %v310 = vld [vmem:[%s186 + $0x2d0] sm:$0xff]
        %v311 = vld [vmem:[%s186 + $0x2d8] sm:$0xff]
        %v312 = vld [vmem:[%s186 + $0x2e0] sm:$0xff]
        %v313 = vld [vmem:[%s186 + $0x2e8] sm:$0xff]
        %v314 = vld [vmem:[%s186 + $0x2f0] sm:$0xff]
        %v315 = vld [vmem:[%s186 + $0x2f8] sm:$0xff]
        %v316 = vld [vmem:[%s186 + $0x300] sm:$0xff]
        %v317 = vld [vmem:[%s186 + $0x308] sm:$0xff]
        %v318 = vld [vmem:[%s186 + $0x310] sm:$0xff]
        %v319 = vld [vmem:[%s186 + $0x318] sm:$0xff]
        %v320 = vld [vmem:[%s186 + $0x320] sm:$0xff]
        %v321 = vld [vmem:[%s186 + $0x328] sm:$0xff]
        %v322 = vld [vmem:[%s186 + $0x330] sm:$0xff]
        %v323 = vld [vmem:[%s186 + $0x338] sm:$0xff]
        %v324 = vld [vmem:[%s186 + $0x340] sm:$0xff]
        %v325 = vld [vmem:[%s186 + $0x348] sm:$0xff]
        %v326 = vld [vmem:[%s186 + $0x350] sm:$0xff]
        %v327 = vld [vmem:[%s186 + $0x358] sm:$0xff]
        %v328 = vld [vmem:[%s186 + $0x360] sm:$0xff]
        %v329 = vld [vmem:[%s186 + $0x368] sm:$0xff]
        %v330 = vld [vmem:[%s186 + $0x370] sm:$0xff]
        %v331 = vld [vmem:[%s186 + $0x378] sm:$0xff]
        %v332 = vld [vmem:[%s186 + $0x380] sm:$0xff]
        %v333 = vld [vmem:[%s186 + $0x388] sm:$0xff]
        %v334 = vld [vmem:[%s186 + $0x390] sm:$0xff]
        %v335 = vld [vmem:[%s186 + $0x398] sm:$0xff]
        %v336 = vld [vmem:[%s186 + $0x3a0] sm:$0xff]
        %v337 = vld [vmem:[%s186 + $0x3a8] sm:$0xff]
        %v338 = vld [vmem:[%s186 + $0x3b0] sm:$0xff]
        %v339 = vld [vmem:[%s186 + $0x3b8] sm:$0xff]
        %v340 = vld [vmem:[%s186 + $0x3c0] sm:$0xff]
        %v341 = vld [vmem:[%s186 + $0x3c8] sm:$0xff]
        %v342 = vld [vmem:[%s186 + $0x3d0] sm:$0xff]
        %v343 = vld [vmem:[%s186 + $0x3d8] sm:$0xff]
        %v344 = vld [vmem:[%s186 + $0x3e0] sm:$0xff]
        %v345 = vld [vmem:[%s186 + $0x3e8] sm:$0xff]
        %v346 = vld [vmem:[%s186 + $0x3f0] sm:$0xff]
        %v347 = vld [vmem:[%s186 + $0x3f8] sm:$0xff]
        %v348 = vld [vmem:[#allocation5] sm:$0xf]
        %v349 = vld [vmem:[#allocation5 + $0x4] sm:$0xf]
        %v350 = vld [vmem:[#allocation5 + $0x8] sm:$0xf]
        %v351 = vld [vmem:[#allocation5 + $0xc] sm:$0xf]
        %v352 = vld [vmem:[#allocation5 + $0x10] sm:$0xf]
        %v353 = vld [vmem:[#allocation5 + $0x14] sm:$0xf]
        %v354 = vld [vmem:[#allocation5 + $0x18] sm:$0xf]
        %v355 = vld [vmem:[#allocation5 + $0x1c] sm:$0xf]
        %v356 = vld [vmem:[#allocation5 + $0x20] sm:$0xf]
        %v357 = vld [vmem:[#allocation5 + $0x24] sm:$0xf]
        %v358 = vld [vmem:[#allocation5 + $0x28] sm:$0xf]
        %v359 = vld [vmem:[#allocation5 + $0x2c] sm:$0xf]
        %v360 = vld [vmem:[#allocation5 + $0x30] sm:$0xf]
        %v361 = vld [vmem:[#allocation5 + $0x34] sm:$0xf]
        %v362 = vld [vmem:[#allocation5 + $0x38] sm:$0xf]
        %v363 = vld [vmem:[#allocation5 + $0x3c] sm:$0xf]
        %v364 = vld [vmem:[#allocation5 + $0x40] sm:$0xf]
        %v365 = vld [vmem:[#allocation5 + $0x44] sm:$0xf]
        %v366 = vld [vmem:[#allocation5 + $0x48] sm:$0xf]
        %v367 = vld [vmem:[#allocation5 + $0x4c] sm:$0xf]
        %v368 = vld [vmem:[#allocation5 + $0x50] sm:$0xf]
        %v369 = vld [vmem:[#allocation5 + $0x54] sm:$0xf]
        %v370 = vld [vmem:[#allocation5 + $0x58] sm:$0xf]
        %v371 = vld [vmem:[#allocation5 + $0x5c] sm:$0xf]
        %v372 = vld [vmem:[#allocation5 + $0x60] sm:$0xf]
        %v373 = vld [vmem:[#allocation5 + $0x64] sm:$0xf]
        %v374 = vld [vmem:[#allocation5 + $0x68] sm:$0xf]
        %v375 = vld [vmem:[#allocation5 + $0x6c] sm:$0xf]
        %v376 = vld [vmem:[#allocation5 + $0x70] sm:$0xf]
        %v377 = vld [vmem:[#allocation5 + $0x74] sm:$0xf]
        %v378 = vld [vmem:[#allocation5 + $0x78] sm:$0xf]
        %v379 = vld [vmem:[#allocation5 + $0x7c] sm:$0xf]
        %v380 = vld [vmem:[#allocation7] sm:$0x1]
        %v382 = vlaneseq
        %v383 = vshrl.u32 %v382, 7
        %v384 = vsub.s32 0, %v383
        %v385 = vrot.slane %v380, %v384
        %v515 = vunpack.c.l.b16 %v220
        %v516 = vunpack.c.h.b16 %v220
        %v517 = vunpack.c.l.b16 %v221
        %v518 = vunpack.c.h.b16 %v221
        %v519 = vunpack.c.l.b16 %v222
        %v520 = vunpack.c.h.b16 %v222
        %v521 = vunpack.c.l.b16 %v223
        %v522 = vunpack.c.h.b16 %v223
        %v523 = vunpack.c.l.b16 %v224
        %v524 = vunpack.c.h.b16 %v224
        %v525 = vunpack.c.l.b16 %v225
        %v526 = vunpack.c.h.b16 %v225
        %v527 = vunpack.c.l.b16 %v226
        %v528 = vunpack.c.h.b16 %v226
        %v529 = vunpack.c.l.b16 %v227
        %v530 = vunpack.c.h.b16 %v227
        %v531 = vunpack.c.l.b16 %v228
        %v532 = vunpack.c.h.b16 %v228
        %v533 = vunpack.c.l.b16 %v229
        %v534 = vunpack.c.h.b16 %v229
        %v535 = vunpack.c.l.b16 %v230
        %v536 = vunpack.c.h.b16 %v230
        %v537 = vunpack.c.l.b16 %v231
        %v538 = vunpack.c.h.b16 %v231
        %v539 = vunpack.c.l.b16 %v232
        %v540 = vunpack.c.h.b16 %v232
        %v541 = vunpack.c.l.b16 %v233
        %v542 = vunpack.c.h.b16 %v233
        %v543 = vunpack.c.l.b16 %v234
        %v544 = vunpack.c.h.b16 %v234
        %v545 = vunpack.c.l.b16 %v235
        %v546 = vunpack.c.h.b16 %v235
        %v547 = vunpack.c.l.b16 %v236
        %v548 = vunpack.c.h.b16 %v236
        %v549 = vunpack.c.l.b16 %v237
        %v550 = vunpack.c.h.b16 %v237
        %v551 = vunpack.c.l.b16 %v238
        %v552 = vunpack.c.h.b16 %v238
        %v553 = vunpack.c.l.b16 %v239
        %v554 = vunpack.c.h.b16 %v239
        %v555 = vunpack.c.l.b16 %v240
        %v556 = vunpack.c.h.b16 %v240
        %v557 = vunpack.c.l.b16 %v241
        %v558 = vunpack.c.h.b16 %v241
        %v559 = vunpack.c.l.b16 %v242
        %v560 = vunpack.c.h.b16 %v242
        %v561 = vunpack.c.l.b16 %v243
        %v562 = vunpack.c.h.b16 %v243
        %v563 = vunpack.c.l.b16 %v244
        %v564 = vunpack.c.h.b16 %v244
        %v565 = vunpack.c.l.b16 %v245
        %v566 = vunpack.c.h.b16 %v245
        %v567 = vunpack.c.l.b16 %v246
        %v568 = vunpack.c.h.b16 %v246
        %v569 = vunpack.c.l.b16 %v247
        %v570 = vunpack.c.h.b16 %v247
        %v571 = vunpack.c.l.b16 %v248
        %v572 = vunpack.c.h.b16 %v248
        %v573 = vunpack.c.l.b16 %v249
        %v574 = vunpack.c.h.b16 %v249
        %v575 = vunpack.c.l.b16 %v250
        %v576 = vunpack.c.h.b16 %v250
        %v577 = vunpack.c.l.b16 %v251
        %v578 = vunpack.c.h.b16 %v251
        %v579 = vunpack.c.l.b16 %v252
        %v580 = vunpack.c.h.b16 %v252
        %v581 = vunpack.c.l.b16 %v253
        %v582 = vunpack.c.h.b16 %v253
        %v583 = vunpack.c.l.b16 %v254
        %v584 = vunpack.c.h.b16 %v254
        %v585 = vunpack.c.l.b16 %v255
        %v586 = vunpack.c.h.b16 %v255
        %v587 = vunpack.c.l.b16 %v256
        %v588 = vunpack.c.h.b16 %v256
        %v589 = vunpack.c.l.b16 %v257
        %v590 = vunpack.c.h.b16 %v257
        %v591 = vunpack.c.l.b16 %v258
        %v592 = vunpack.c.h.b16 %v258
        %v593 = vunpack.c.l.b16 %v259
        %v594 = vunpack.c.h.b16 %v259
        %v595 = vunpack.c.l.b16 %v260
        %v596 = vunpack.c.h.b16 %v260
        %v597 = vunpack.c.l.b16 %v261
        %v598 = vunpack.c.h.b16 %v261
        %v599 = vunpack.c.l.b16 %v262
        %v600 = vunpack.c.h.b16 %v262
        %v601 = vunpack.c.l.b16 %v263
        %v602 = vunpack.c.h.b16 %v263
        %v603 = vunpack.c.l.b16 %v264
        %v604 = vunpack.c.h.b16 %v264
        %v605 = vunpack.c.l.b16 %v265
        %v606 = vunpack.c.h.b16 %v265
        %v607 = vunpack.c.l.b16 %v266
        %v608 = vunpack.c.h.b16 %v266
        %v609 = vunpack.c.l.b16 %v267
        %v610 = vunpack.c.h.b16 %v267
        %v611 = vunpack.c.l.b16 %v268
        %v612 = vunpack.c.h.b16 %v268
        %v613 = vunpack.c.l.b16 %v269
        %v614 = vunpack.c.h.b16 %v269
        %v615 = vunpack.c.l.b16 %v270
        %v616 = vunpack.c.h.b16 %v270
        %v617 = vunpack.c.l.b16 %v271
        %v618 = vunpack.c.h.b16 %v271
        %v619 = vunpack.c.l.b16 %v272
        %v620 = vunpack.c.h.b16 %v272
        %v621 = vunpack.c.l.b16 %v273
        %v622 = vunpack.c.h.b16 %v273
        %v623 = vunpack.c.l.b16 %v274
        %v624 = vunpack.c.h.b16 %v274
        %v625 = vunpack.c.l.b16 %v275
        %v626 = vunpack.c.h.b16 %v275
        %v627 = vunpack.c.l.b16 %v276
        %v628 = vunpack.c.h.b16 %v276
        %v629 = vunpack.c.l.b16 %v277
        %v630 = vunpack.c.h.b16 %v277
        %v631 = vunpack.c.l.b16 %v278
        %v632 = vunpack.c.h.b16 %v278
        %v633 = vunpack.c.l.b16 %v279
        %v634 = vunpack.c.h.b16 %v279
        %v635 = vunpack.c.l.b16 %v280
        %v636 = vunpack.c.h.b16 %v280
        %v637 = vunpack.c.l.b16 %v281
        %v638 = vunpack.c.h.b16 %v281
        %v639 = vunpack.c.l.b16 %v282
        %v640 = vunpack.c.h.b16 %v282
        %v641 = vunpack.c.l.b16 %v283
        %v642 = vunpack.c.h.b16 %v283
        %v643 = vunpack.c.l.b16 %v284
        %v644 = vunpack.c.h.b16 %v284
        %v645 = vunpack.c.l.b16 %v285
        %v646 = vunpack.c.h.b16 %v285
        %v647 = vunpack.c.l.b16 %v286
        %v648 = vunpack.c.h.b16 %v286
        %v649 = vunpack.c.l.b16 %v287
        %v650 = vunpack.c.h.b16 %v287
        %v651 = vunpack.c.l.b16 %v288
        %v652 = vunpack.c.h.b16 %v288
        %v653 = vunpack.c.l.b16 %v289
        %v654 = vunpack.c.h.b16 %v289
        %v655 = vunpack.c.l.b16 %v290
        %v656 = vunpack.c.h.b16 %v290
        %v657 = vunpack.c.l.b16 %v291
        %v658 = vunpack.c.h.b16 %v291
        %v659 = vunpack.c.l.b16 %v292
        %v660 = vunpack.c.h.b16 %v292
        %v661 = vunpack.c.l.b16 %v293
        %v662 = vunpack.c.h.b16 %v293
        %v663 = vunpack.c.l.b16 %v294
        %v664 = vunpack.c.h.b16 %v294
        %v665 = vunpack.c.l.b16 %v295
        %v666 = vunpack.c.h.b16 %v295
        %v667 = vunpack.c.l.b16 %v296
        %v668 = vunpack.c.h.b16 %v296
        %v669 = vunpack.c.l.b16 %v297
        %v670 = vunpack.c.h.b16 %v297
        %v671 = vunpack.c.l.b16 %v298
        %v672 = vunpack.c.h.b16 %v298
        %v673 = vunpack.c.l.b16 %v299
        %v674 = vunpack.c.h.b16 %v299
        %v675 = vunpack.c.l.b16 %v300
        %v676 = vunpack.c.h.b16 %v300
        %v677 = vunpack.c.l.b16 %v301
        %v678 = vunpack.c.h.b16 %v301
        %v679 = vunpack.c.l.b16 %v302
        %v680 = vunpack.c.h.b16 %v302
        %v681 = vunpack.c.l.b16 %v303
        %v682 = vunpack.c.h.b16 %v303
        %v683 = vunpack.c.l.b16 %v304
        %v684 = vunpack.c.h.b16 %v304
        %v685 = vunpack.c.l.b16 %v305
        %v686 = vunpack.c.h.b16 %v305
        %v687 = vunpack.c.l.b16 %v306
        %v688 = vunpack.c.h.b16 %v306
        %v689 = vunpack.c.l.b16 %v307
        %v690 = vunpack.c.h.b16 %v307
        %v691 = vunpack.c.l.b16 %v308
        %v692 = vunpack.c.h.b16 %v308
        %v693 = vunpack.c.l.b16 %v309
        %v694 = vunpack.c.h.b16 %v309
        %v695 = vunpack.c.l.b16 %v310
        %v696 = vunpack.c.h.b16 %v310
        %v697 = vunpack.c.l.b16 %v311
        %v698 = vunpack.c.h.b16 %v311
        %v699 = vunpack.c.l.b16 %v312
        %v700 = vunpack.c.h.b16 %v312
        %v701 = vunpack.c.l.b16 %v313
        %v702 = vunpack.c.h.b16 %v313
        %v703 = vunpack.c.l.b16 %v314
        %v704 = vunpack.c.h.b16 %v314
        %v705 = vunpack.c.l.b16 %v315
        %v706 = vunpack.c.h.b16 %v315
        %v707 = vunpack.c.l.b16 %v316
        %v708 = vunpack.c.h.b16 %v316
        %v709 = vunpack.c.l.b16 %v317
        %v710 = vunpack.c.h.b16 %v317
        %v711 = vunpack.c.l.b16 %v318
        %v712 = vunpack.c.h.b16 %v318
        %v713 = vunpack.c.l.b16 %v319
        %v714 = vunpack.c.h.b16 %v319
        %v715 = vunpack.c.l.b16 %v320
        %v716 = vunpack.c.h.b16 %v320
        %v717 = vunpack.c.l.b16 %v321
        %v718 = vunpack.c.h.b16 %v321
        %v719 = vunpack.c.l.b16 %v322
        %v720 = vunpack.c.h.b16 %v322
        %v721 = vunpack.c.l.b16 %v323
        %v722 = vunpack.c.h.b16 %v323
        %v723 = vunpack.c.l.b16 %v324
        %v724 = vunpack.c.h.b16 %v324
        %v725 = vunpack.c.l.b16 %v325
        %v726 = vunpack.c.h.b16 %v325
        %v727 = vunpack.c.l.b16 %v326
        %v728 = vunpack.c.h.b16 %v326
        %v729 = vunpack.c.l.b16 %v327
        %v730 = vunpack.c.h.b16 %v327
        %v731 = vunpack.c.l.b16 %v328
        %v732 = vunpack.c.h.b16 %v328
        %v733 = vunpack.c.l.b16 %v329
        %v734 = vunpack.c.h.b16 %v329
        %v735 = vunpack.c.l.b16 %v330
        %v736 = vunpack.c.h.b16 %v330
        %v737 = vunpack.c.l.b16 %v331
        %v738 = vunpack.c.h.b16 %v331
        %v739 = vunpack.c.l.b16 %v332
        %v740 = vunpack.c.h.b16 %v332
        %v741 = vunpack.c.l.b16 %v333
        %v742 = vunpack.c.h.b16 %v333
        %v743 = vunpack.c.l.b16 %v334
        %v744 = vunpack.c.h.b16 %v334
        %v745 = vunpack.c.l.b16 %v335
        %v746 = vunpack.c.h.b16 %v335
        %v747 = vunpack.c.l.b16 %v336
        %v748 = vunpack.c.h.b16 %v336
        %v749 = vunpack.c.l.b16 %v337
        %v750 = vunpack.c.h.b16 %v337
        %v751 = vunpack.c.l.b16 %v338
        %v752 = vunpack.c.h.b16 %v338
        %v753 = vunpack.c.l.b16 %v339
        %v754 = vunpack.c.h.b16 %v339
        %v755 = vunpack.c.l.b16 %v340
        %v756 = vunpack.c.h.b16 %v340
        %v757 = vunpack.c.l.b16 %v341
        %v758 = vunpack.c.h.b16 %v341
        %v759 = vunpack.c.l.b16 %v342
        %v760 = vunpack.c.h.b16 %v342
        %v761 = vunpack.c.l.b16 %v343
        %v762 = vunpack.c.h.b16 %v343
        %v763 = vunpack.c.l.b16 %v344
        %v764 = vunpack.c.h.b16 %v344
        %v765 = vunpack.c.l.b16 %v345
        %v766 = vunpack.c.h.b16 %v345
        %v767 = vunpack.c.l.b16 %v346
        %v768 = vunpack.c.h.b16 %v346
        %v769 = vunpack.c.l.b16 %v347
        %v770 = vunpack.c.h.b16 %v347
        %v771 = vpack.c.b16 %v517, %v515
        %v772 = vpack.c.b16 %v518, %v516
        %v773 = vpack.c.b16 %v521, %v519
        %v774 = vpack.c.b16 %v522, %v520
        %v775 = vpack.c.b16 %v525, %v523
        %v776 = vpack.c.b16 %v526, %v524
        %v777 = vpack.c.b16 %v529, %v527
        %v778 = vpack.c.b16 %v530, %v528
        %v779 = vpack.c.b16 %v533, %v531
        %v780 = vpack.c.b16 %v534, %v532
        %v781 = vpack.c.b16 %v537, %v535
        %v782 = vpack.c.b16 %v538, %v536
        %v783 = vpack.c.b16 %v541, %v539
        %v784 = vpack.c.b16 %v542, %v540
        %v785 = vpack.c.b16 %v545, %v543
        %v786 = vpack.c.b16 %v546, %v544
        %v787 = vpack.c.b16 %v549, %v547
        %v788 = vpack.c.b16 %v550, %v548
        %v789 = vpack.c.b16 %v553, %v551
        %v790 = vpack.c.b16 %v554, %v552
        %v791 = vpack.c.b16 %v557, %v555
        %v792 = vpack.c.b16 %v558, %v556
        %v793 = vpack.c.b16 %v561, %v559
        %v794 = vpack.c.b16 %v562, %v560
        %v795 = vpack.c.b16 %v565, %v563
        %v796 = vpack.c.b16 %v566, %v564
        %v797 = vpack.c.b16 %v569, %v567
        %v798 = vpack.c.b16 %v570, %v568
        %v799 = vpack.c.b16 %v573, %v571
        %v800 = vpack.c.b16 %v574, %v572
        %v801 = vpack.c.b16 %v577, %v575
        %v802 = vpack.c.b16 %v578, %v576
        %v803 = vpack.c.b16 %v581, %v579
        %v804 = vpack.c.b16 %v582, %v580
        %v805 = vpack.c.b16 %v585, %v583
        %v806 = vpack.c.b16 %v586, %v584
        %v807 = vpack.c.b16 %v589, %v587
        %v808 = vpack.c.b16 %v590, %v588
        %v809 = vpack.c.b16 %v593, %v591
        %v810 = vpack.c.b16 %v594, %v592
        %v811 = vpack.c.b16 %v597, %v595
        %v812 = vpack.c.b16 %v598, %v596
        %v813 = vpack.c.b16 %v601, %v599
        %v814 = vpack.c.b16 %v602, %v600
        %v815 = vpack.c.b16 %v605, %v603
        %v816 = vpack.c.b16 %v606, %v604
        %v817 = vpack.c.b16 %v609, %v607
        %v818 = vpack.c.b16 %v610, %v608
        %v819 = vpack.c.b16 %v613, %v611
        %v820 = vpack.c.b16 %v614, %v612
        %v821 = vpack.c.b16 %v617, %v615
        %v822 = vpack.c.b16 %v618, %v616
        %v823 = vpack.c.b16 %v621, %v619
        %v824 = vpack.c.b16 %v622, %v620
        %v825 = vpack.c.b16 %v625, %v623
        %v826 = vpack.c.b16 %v626, %v624
        %v827 = vpack.c.b16 %v629, %v627
        %v828 = vpack.c.b16 %v630, %v628
        %v829 = vpack.c.b16 %v633, %v631
        %v830 = vpack.c.b16 %v634, %v632
        %v831 = vpack.c.b16 %v637, %v635
        %v832 = vpack.c.b16 %v638, %v636
        %v833 = vpack.c.b16 %v641, %v639
        %v834 = vpack.c.b16 %v642, %v640
        %v835 = vpack.c.b16 %v645, %v643
        %v836 = vpack.c.b16 %v646, %v644
        %v837 = vpack.c.b16 %v649, %v647
        %v838 = vpack.c.b16 %v650, %v648
        %v839 = vpack.c.b16 %v653, %v651
        %v840 = vpack.c.b16 %v654, %v652
        %v841 = vpack.c.b16 %v657, %v655
        %v842 = vpack.c.b16 %v658, %v656
        %v843 = vpack.c.b16 %v661, %v659
        %v844 = vpack.c.b16 %v662, %v660
        %v845 = vpack.c.b16 %v665, %v663
        %v846 = vpack.c.b16 %v666, %v664
        %v847 = vpack.c.b16 %v669, %v667
        %v848 = vpack.c.b16 %v670, %v668
        %v849 = vpack.c.b16 %v673, %v671
        %v850 = vpack.c.b16 %v674, %v672
        %v851 = vpack.c.b16 %v677, %v675
        %v852 = vpack.c.b16 %v678, %v676
        %v853 = vpack.c.b16 %v681, %v679
        %v854 = vpack.c.b16 %v682, %v680
        %v855 = vpack.c.b16 %v685, %v683
        %v856 = vpack.c.b16 %v686, %v684
        %v857 = vpack.c.b16 %v689, %v687
        %v858 = vpack.c.b16 %v690, %v688
        %v859 = vpack.c.b16 %v693, %v691
        %v860 = vpack.c.b16 %v694, %v692
        %v861 = vpack.c.b16 %v697, %v695
        %v862 = vpack.c.b16 %v698, %v696
        %v863 = vpack.c.b16 %v701, %v699
        %v864 = vpack.c.b16 %v702, %v700
        %v865 = vpack.c.b16 %v705, %v703
        %v866 = vpack.c.b16 %v706, %v704
        %v867 = vpack.c.b16 %v709, %v707
        %v868 = vpack.c.b16 %v710, %v708
        %v869 = vpack.c.b16 %v713, %v711
        %v870 = vpack.c.b16 %v714, %v712
        %v871 = vpack.c.b16 %v717, %v715
        %v872 = vpack.c.b16 %v718, %v716
        %v873 = vpack.c.b16 %v721, %v719
        %v874 = vpack.c.b16 %v722, %v720
        %v875 = vpack.c.b16 %v725, %v723
        %v876 = vpack.c.b16 %v726, %v724
        %v877 = vpack.c.b16 %v729, %v727
        %v878 = vpack.c.b16 %v730, %v728
        %v879 = vpack.c.b16 %v733, %v731
        %v880 = vpack.c.b16 %v734, %v732
        %v881 = vpack.c.b16 %v737, %v735
        %v882 = vpack.c.b16 %v738, %v736
        %v883 = vpack.c.b16 %v741, %v739
        %v884 = vpack.c.b16 %v742, %v740
        %v885 = vpack.c.b16 %v745, %v743
        %v886 = vpack.c.b16 %v746, %v744
        %v887 = vpack.c.b16 %v749, %v747
        %v888 = vpack.c.b16 %v750, %v748
        %v889 = vpack.c.b16 %v753, %v751
        %v890 = vpack.c.b16 %v754, %v752
        %v891 = vpack.c.b16 %v757, %v755
        %v892 = vpack.c.b16 %v758, %v756
        %v893 = vpack.c.b16 %v761, %v759
        %v894 = vpack.c.b16 %v762, %v760
        %v895 = vpack.c.b16 %v765, %v763
        %v896 = vpack.c.b16 %v766, %v764
        %v897 = vpack.c.b16 %v769, %v767
        %v898 = vpack.c.b16 %v770, %v768
        %v1059 = vunpack.c.l.b16 %v348
        %v1060 = vunpack.c.l.b16 %v349
        %v1061 = vunpack.c.l.b16 %v350
        %v1062 = vunpack.c.l.b16 %v351
        %v1063 = vunpack.c.l.b16 %v352
        %v1064 = vunpack.c.l.b16 %v353
        %v1065 = vunpack.c.l.b16 %v354
        %v1066 = vunpack.c.l.b16 %v355
        %v1067 = vunpack.c.l.b16 %v356
        %v1068 = vunpack.c.l.b16 %v357
        %v1069 = vunpack.c.l.b16 %v358
        %v1070 = vunpack.c.l.b16 %v359
        %v1071 = vunpack.c.l.b16 %v360
        %v1072 = vunpack.c.l.b16 %v361
        %v1073 = vunpack.c.l.b16 %v362
        %v1074 = vunpack.c.l.b16 %v363
        %v1075 = vunpack.c.l.b16 %v364
        %v1076 = vunpack.c.l.b16 %v365
        %v1077 = vunpack.c.l.b16 %v366
        %v1078 = vunpack.c.l.b16 %v367
        %v1079 = vunpack.c.l.b16 %v368
        %v1080 = vunpack.c.l.b16 %v369
        %v1081 = vunpack.c.l.b16 %v370
        %v1082 = vunpack.c.l.b16 %v371
        %v1083 = vunpack.c.l.b16 %v372
        %v1084 = vunpack.c.l.b16 %v373
        %v1085 = vunpack.c.l.b16 %v374
        %v1086 = vunpack.c.l.b16 %v375
        %v1087 = vunpack.c.l.b16 %v376
        %v1088 = vunpack.c.l.b16 %v377
        %v1089 = vunpack.c.l.b16 %v378
        %v1090 = vunpack.c.l.b16 %v379
        %v1091 = vpack.c.b16 %v1060, %v1059
        %v1092 = vpack.c.b16 %v1062, %v1061
        %v1093 = vpack.c.b16 %v1064, %v1063
        %v1094 = vpack.c.b16 %v1066, %v1065
        %v1095 = vpack.c.b16 %v1068, %v1067
        %v1096 = vpack.c.b16 %v1070, %v1069
        %v1097 = vpack.c.b16 %v1072, %v1071
        %v1098 = vpack.c.b16 %v1074, %v1073
        %v1099 = vpack.c.b16 %v1076, %v1075
        %v1100 = vpack.c.b16 %v1078, %v1077
        %v1101 = vpack.c.b16 %v1080, %v1079
        %v1102 = vpack.c.b16 %v1082, %v1081
        %v1103 = vpack.c.b16 %v1084, %v1083
        %v1104 = vpack.c.b16 %v1086, %v1085
        %v1105 = vpack.c.b16 %v1088, %v1087
        %v1106 = vpack.c.b16 %v1090, %v1089
        %1123 = vmatprep.subr.bf16.mxu0 0
        %1124 = vmatpush1.bf16.msra.mxu0 %v1091
        %1125 = vmatprep.subr.bf16.mxu0 0
        %1126 = vmatpush1.bf16.msra.mxu0 %v1092
        %1127 = vmatprep.subr.bf16.mxu0 0
        %1128 = vmatpush1.bf16.msra.mxu0 %v1093
        %1129 = vmatprep.subr.bf16.mxu0 0
        %1130 = vmatpush1.bf16.msra.mxu0 %v1094
        %1131 = vmatprep.subr.bf16.mxu0 0
        %1132 = vmatpush1.bf16.msra.mxu0 %v1095
        %1133 = vmatprep.subr.bf16.mxu0 0
        %1134 = vmatpush1.bf16.msra.mxu0 %v1096
        %1135 = vmatprep.subr.bf16.mxu0 0
        %1136 = vmatpush1.bf16.msra.mxu0 %v1097
        %1137 = vmatprep.subr.bf16.mxu0 0
        %1138 = vmatpush1.bf16.msra.mxu0 %v1098
        %1139 = vmatprep.subr.bf16.mxu0 0
        %1140 = vmatpush1.bf16.msra.mxu0 %v1099
        %1141 = vmatprep.subr.bf16.mxu0 0
        %1142 = vmatpush1.bf16.msra.mxu0 %v1100
        %1143 = vmatprep.subr.bf16.mxu0 0
        %1144 = vmatpush1.bf16.msra.mxu0 %v1101
        %1145 = vmatprep.subr.bf16.mxu0 0
        %1146 = vmatpush1.bf16.msra.mxu0 %v1102
        %1147 = vmatprep.subr.bf16.mxu0 0
        %1148 = vmatpush1.bf16.msra.mxu0 %v1103
        %1149 = vmatprep.subr.bf16.mxu0 0
        %1150 = vmatpush1.bf16.msra.mxu0 %v1104
        %1151 = vmatprep.subr.bf16.mxu0 0
        %1152 = vmatpush1.bf16.msra.mxu0 %v1105
        %1153 = vmatprep.subr.bf16.mxu0 0
        %1154 = vmatpush1.bf16.msra.mxu0 %v1106
        %1155 = vmatprep.mubr.bf16.mxu0 %v772
        %1156 = vmatmul.mubr.bf16.gmra.mrb[0].mxu0 %v771
        %v1157 = vpop.f32.mrb[0].mxu0
        %v1158 = vadd.f32 %v385, %v1157
        %v1159 = vpop.f32.mrb[0].mxu0
        %v1160 = vpop.f32.mrb[0].mxu0
        %v1161 = vadd.f32 %v385, %v1160
        %v1162 = vpop.f32.mrb[0].mxu0
        %1163 = vmatprep.mubr.bf16.mxu0 %v774
        %1164 = vmatmul.mubr.bf16.gmra.mrb[0].mxu0 %v773
        %v1165 = vpop.f32.mrb[0].mxu0
        %v1166 = vadd.f32 %v385, %v1165
        %v1167 = vpop.f32.mrb[0].mxu0
        %v1168 = vpop.f32.mrb[0].mxu0
        %v1169 = vadd.f32 %v385, %v1168
        %v1170 = vpop.f32.mrb[0].mxu0
        %1171 = vmatprep.mubr.bf16.mxu0 %v776
        %1172 = vmatmul.mubr.bf16.gmra.mrb[0].mxu0 %v775
        %v1173 = vpop.f32.mrb[0].mxu0
        %v1174 = vadd.f32 %v385, %v1173
        %v1175 = vpop.f32.mrb[0].mxu0
        %v1176 = vpop.f32.mrb[0].mxu0
        %v1177 = vadd.f32 %v385, %v1176
        %v1178 = vpop.f32.mrb[0].mxu0
        %1179 = vmatprep.mubr.bf16.mxu0 %v778
        %1180 = vmatmul.mubr.bf16.gmra.mrb[0].mxu0 %v777
        %v1181 = vpop.f32.mrb[0].mxu0
        %v1182 = vadd.f32 %v385, %v1181
        %v1183 = vpop.f32.mrb[0].mxu0
        %v1184 = vpop.f32.mrb[0].mxu0
        %v1185 = vadd.f32 %v385, %v1184
        %v1186 = vpop.f32.mrb[0].mxu0
        %1187 = vmatprep.mubr.bf16.mxu0 %v780
        %1188 = vmatmul.mubr.bf16.gmra.mrb[0].mxu0 %v779
        %v1189 = vpop.f32.mrb[0].mxu0
        %v1190 = vadd.f32 %v385, %v1189
        %v1191 = vpop.f32.mrb[0].mxu0
        %v1192 = vpop.f32.mrb[0].mxu0
        %v1193 = vadd.f32 %v385, %v1192
        %v1194 = vpop.f32.mrb[0].mxu0
        %1195 = vmatprep.mubr.bf16.mxu0 %v782
        %1196 = vmatmul.mubr.bf16.gmra.mrb[0].mxu0 %v781
        %v1197 = vpop.f32.mrb[0].mxu0
        %v1198 = vadd.f32 %v385, %v1197
        %v1199 = vpop.f32.mrb[0].mxu0
        %v1200 = vpop.f32.mrb[0].mxu0
        %v1201 = vadd.f32 %v385, %v1200
        %v1202 = vpop.f32.mrb[0].mxu0
        %1203 = vmatprep.mubr.bf16.mxu0 %v784
        %1204 = vmatmul.mubr.bf16.gmra.mrb[0].mxu0 %v783
        %v1205 = vpop.f32.mrb[0].mxu0
        %v1206 = vadd.f32 %v385, %v1205
        %v1207 = vpop.f32.mrb[0].mxu0
        %v1208 = vpop.f32.mrb[0].mxu0
        %v1209 = vadd.f32 %v385, %v1208
        %v1210 = vpop.f32.mrb[0].mxu0
        %1211 = vmatprep.mubr.bf16.mxu0 %v786
        %1212 = vmatmul.mubr.bf16.gmra.mrb[0].mxu0 %v785
        %v1213 = vpop.f32.mrb[0].mxu0
        %v1214 = vadd.f32 %v385, %v1213
        %v1215 = vpop.f32.mrb[0].mxu0
        %v1216 = vpop.f32.mrb[0].mxu0
        %v1217 = vadd.f32 %v385, %v1216
        %v1218 = vpop.f32.mrb[0].mxu0
        %1219 = vmatprep.mubr.bf16.mxu0 %v788
        %1220 = vmatmul.mubr.bf16.gmra.mrb[0].mxu0 %v787
        %v1221 = vpop.f32.mrb[0].mxu0
        %v1222 = vadd.f32 %v385, %v1221
        %v1223 = vpop.f32.mrb[0].mxu0
        %v1224 = vpop.f32.mrb[0].mxu0
        %v1225 = vadd.f32 %v385, %v1224
        %v1226 = vpop.f32.mrb[0].mxu0
        %1227 = vmatprep.mubr.bf16.mxu0 %v790
        %1228 = vmatmul.mubr.bf16.gmra.mrb[0].mxu0 %v789
        %v1229 = vpop.f32.mrb[0].mxu0
        %v1230 = vadd.f32 %v385, %v1229
        %v1231 = vpop.f32.mrb[0].mxu0
        %v1232 = vpop.f32.mrb[0].mxu0
        %v1233 = vadd.f32 %v385, %v1232
        %v1234 = vpop.f32.mrb[0].mxu0
        %1235 = vmatprep.mubr.bf16.mxu0 %v792
        %1236 = vmatmul.mubr.bf16.gmra.mrb[0].mxu0 %v791
        %v1237 = vpop.f32.mrb[0].mxu0
        %v1238 = vadd.f32 %v385, %v1237
        %v1239 = vpop.f32.mrb[0].mxu0
        %v1240 = vpop.f32.mrb[0].mxu0
        %v1241 = vadd.f32 %v385, %v1240
        %v1242 = vpop.f32.mrb[0].mxu0
        %1243 = vmatprep.mubr.bf16.mxu0 %v794
        %1244 = vmatmul.mubr.bf16.gmra.mrb[0].mxu0 %v793
        %v1245 = vpop.f32.mrb[0].mxu0
        %v1246 = vadd.f32 %v385, %v1245
        %v1247 = vpop.f32.mrb[0].mxu0
        %v1248 = vpop.f32.mrb[0].mxu0
        %v1249 = vadd.f32 %v385, %v1248
        %v1250 = vpop.f32.mrb[0].mxu0
        %1251 = vmatprep.mubr.bf16.mxu0 %v796
        %1252 = vmatmul.mubr.bf16.gmra.mrb[0].mxu0 %v795
        %v1253 = vpop.f32.mrb[0].mxu0
        %v1254 = vadd.f32 %v385, %v1253
        %v1255 = vpop.f32.mrb[0].mxu0
        %v1256 = vpop.f32.mrb[0].mxu0
        %v1257 = vadd.f32 %v385, %v1256
        %v1258 = vpop.f32.mrb[0].mxu0
        %1259 = vmatprep.mubr.bf16.mxu0 %v798
        %1260 = vmatmul.mubr.bf16.gmra.mrb[0].mxu0 %v797
        %v1261 = vpop.f32.mrb[0].mxu0
        %v1262 = vadd.f32 %v385, %v1261
        %v1263 = vpop.f32.mrb[0].mxu0
        %v1264 = vpop.f32.mrb[0].mxu0
        %v1265 = vadd.f32 %v385, %v1264
        %v1266 = vpop.f32.mrb[0].mxu0
        %1267 = vmatprep.mubr.bf16.mxu0 %v800
        %1268 = vmatmul.mubr.bf16.gmra.mrb[0].mxu0 %v799
        %v1269 = vpop.f32.mrb[0].mxu0
        %v1270 = vadd.f32 %v385, %v1269
        %v1271 = vpop.f32.mrb[0].mxu0
        %v1272 = vpop.f32.mrb[0].mxu0
        %v1273 = vadd.f32 %v385, %v1272
        %v1274 = vpop.f32.mrb[0].mxu0
        %1275 = vmatprep.mubr.bf16.mxu0 %v802
        %1276 = vmatmul.mubr.bf16.gmra.mrb[0].mxu0 %v801
        %v1277 = vpop.f32.mrb[0].mxu0
        %v1278 = vadd.f32 %v385, %v1277
        %v1279 = vpop.f32.mrb[0].mxu0
        %v1280 = vpop.f32.mrb[0].mxu0
        %v1281 = vadd.f32 %v385, %v1280
        %v1282 = vpop.f32.mrb[0].mxu0
        %1283 = vmatprep.mubr.bf16.mxu0 %v804
        %1284 = vmatmul.mubr.bf16.gmra.mrb[0].mxu0 %v803
        %v1285 = vpop.f32.mrb[0].mxu0
        %v1286 = vadd.f32 %v385, %v1285
        %v1287 = vpop.f32.mrb[0].mxu0
        %v1288 = vpop.f32.mrb[0].mxu0
        %v1289 = vadd.f32 %v385, %v1288
        %v1290 = vpop.f32.mrb[0].mxu0
        %1291 = vmatprep.mubr.bf16.mxu0 %v806
        %1292 = vmatmul.mubr.bf16.gmra.mrb[0].mxu0 %v805
        %v1293 = vpop.f32.mrb[0].mxu0
        %v1294 = vadd.f32 %v385, %v1293
        %v1295 = vpop.f32.mrb[0].mxu0
        %v1296 = vpop.f32.mrb[0].mxu0
        %v1297 = vadd.f32 %v385, %v1296
        %v1298 = vpop.f32.mrb[0].mxu0
        %1299 = vmatprep.mubr.bf16.mxu0 %v808
        %1300 = vmatmul.mubr.bf16.gmra.mrb[0].mxu0 %v807
        %v1301 = vpop.f32.mrb[0].mxu0
        %v1302 = vadd.f32 %v385, %v1301
        %v1303 = vpop.f32.mrb[0].mxu0
        %v1304 = vpop.f32.mrb[0].mxu0
        %v1305 = vadd.f32 %v385, %v1304
        %v1306 = vpop.f32.mrb[0].mxu0
        %1307 = vmatprep.mubr.bf16.mxu0 %v810
        %1308 = vmatmul.mubr.bf16.gmra.mrb[0].mxu0 %v809
        %v1309 = vpop.f32.mrb[0].mxu0
        %v1310 = vadd.f32 %v385, %v1309
        %v1311 = vpop.f32.mrb[0].mxu0
        %v1312 = vpop.f32.mrb[0].mxu0
        %v1313 = vadd.f32 %v385, %v1312
        %v1314 = vpop.f32.mrb[0].mxu0
        %1315 = vmatprep.mubr.bf16.mxu0 %v812
        %1316 = vmatmul.mubr.bf16.gmra.mrb[0].mxu0 %v811
        %v1317 = vpop.f32.mrb[0].mxu0
        %v1318 = vadd.f32 %v385, %v1317
        %v1319 = vpop.f32.mrb[0].mxu0
        %v1320 = vpop.f32.mrb[0].mxu0
        %v1321 = vadd.f32 %v385, %v1320
        %v1322 = vpop.f32.mrb[0].mxu0
        %1323 = vmatprep.mubr.bf16.mxu0 %v814
        %1324 = vmatmul.mubr.bf16.gmra.mrb[0].mxu0 %v813
        %v1325 = vpop.f32.mrb[0].mxu0
        %v1326 = vadd.f32 %v385, %v1325
        %v1327 = vpop.f32.mrb[0].mxu0
        %v1328 = vpop.f32.mrb[0].mxu0
        %v1329 = vadd.f32 %v385, %v1328
        %v1330 = vpop.f32.mrb[0].mxu0
        %1331 = vmatprep.mubr.bf16.mxu0 %v816
        %1332 = vmatmul.mubr.bf16.gmra.mrb[0].mxu0 %v815
        %v1333 = vpop.f32.mrb[0].mxu0
        %v1334 = vadd.f32 %v385, %v1333
        %v1335 = vpop.f32.mrb[0].mxu0
        %v1336 = vpop.f32.mrb[0].mxu0
        %v1337 = vadd.f32 %v385, %v1336
        %v1338 = vpop.f32.mrb[0].mxu0
        %1339 = vmatprep.mubr.bf16.mxu0 %v818
        %1340 = vmatmul.mubr.bf16.gmra.mrb[0].mxu0 %v817
        %v1341 = vpop.f32.mrb[0].mxu0
        %v1342 = vadd.f32 %v385, %v1341
        %v1343 = vpop.f32.mrb[0].mxu0
        %v1344 = vpop.f32.mrb[0].mxu0
        %v1345 = vadd.f32 %v385, %v1344
        %v1346 = vpop.f32.mrb[0].mxu0
        %1347 = vmatprep.mubr.bf16.mxu0 %v820
        %1348 = vmatmul.mubr.bf16.gmra.mrb[0].mxu0 %v819
        %v1349 = vpop.f32.mrb[0].mxu0
        %v1350 = vadd.f32 %v385, %v1349
        %v1351 = vpop.f32.mrb[0].mxu0
        %v1352 = vpop.f32.mrb[0].mxu0
        %v1353 = vadd.f32 %v385, %v1352
        %v1354 = vpop.f32.mrb[0].mxu0
        %1355 = vmatprep.mubr.bf16.mxu0 %v822
        %1356 = vmatmul.mubr.bf16.gmra.mrb[0].mxu0 %v821
        %v1357 = vpop.f32.mrb[0].mxu0
        %v1358 = vadd.f32 %v385, %v1357
        %v1359 = vpop.f32.mrb[0].mxu0
        %v1360 = vpop.f32.mrb[0].mxu0
        %v1361 = vadd.f32 %v385, %v1360
        %v1362 = vpop.f32.mrb[0].mxu0
        %1363 = vmatprep.mubr.bf16.mxu0 %v824
        %1364 = vmatmul.mubr.bf16.gmra.mrb[0].mxu0 %v823
        %v1365 = vpop.f32.mrb[0].mxu0
        %v1366 = vadd.f32 %v385, %v1365
        %v1367 = vpop.f32.mrb[0].mxu0
        %v1368 = vpop.f32.mrb[0].mxu0
        %v1369 = vadd.f32 %v385, %v1368
        %v1370 = vpop.f32.mrb[0].mxu0
        %1371 = vmatprep.mubr.bf16.mxu0 %v826
        %1372 = vmatmul.mubr.bf16.gmra.mrb[0].mxu0 %v825
        %v1373 = vpop.f32.mrb[0].mxu0
        %v1374 = vadd.f32 %v385, %v1373
        %v1375 = vpop.f32.mrb[0].mxu0
        %v1376 = vpop.f32.mrb[0].mxu0
        %v1377 = vadd.f32 %v385, %v1376
        %v1378 = vpop.f32.mrb[0].mxu0
        %1379 = vmatprep.mubr.bf16.mxu0 %v828
        %1380 = vmatmul.mubr.bf16.gmra.mrb[0].mxu0 %v827
        %v1381 = vpop.f32.mrb[0].mxu0
        %v1382 = vadd.f32 %v385, %v1381
        %v1383 = vpop.f32.mrb[0].mxu0
        %v1384 = vpop.f32.mrb[0].mxu0
        %v1385 = vadd.f32 %v385, %v1384
        %v1386 = vpop.f32.mrb[0].mxu0
        %1387 = vmatprep.mubr.bf16.mxu0 %v830
        %1388 = vmatmul.mubr.bf16.gmra.mrb[0].mxu0 %v829
        %v1389 = vpop.f32.mrb[0].mxu0
        %v1390 = vadd.f32 %v385, %v1389
        %v1391 = vpop.f32.mrb[0].mxu0
        %v1392 = vpop.f32.mrb[0].mxu0
        %v1393 = vadd.f32 %v385, %v1392
        %v1394 = vpop.f32.mrb[0].mxu0
        %1395 = vmatprep.mubr.bf16.mxu0 %v832
        %1396 = vmatmul.mubr.bf16.gmra.mrb[0].mxu0 %v831
        %v1397 = vpop.f32.mrb[0].mxu0
        %v1398 = vadd.f32 %v385, %v1397
        %v1399 = vpop.f32.mrb[0].mxu0
        %v1400 = vpop.f32.mrb[0].mxu0
        %v1401 = vadd.f32 %v385, %v1400
        %v1402 = vpop.f32.mrb[0].mxu0
        %1403 = vmatprep.mubr.bf16.mxu0 %v834
        %1404 = vmatmul.mubr.bf16.gmra.mrb[0].mxu0 %v833
        %v1405 = vpop.f32.mrb[0].mxu0
        %v1406 = vadd.f32 %v385, %v1405
        %v1407 = vpop.f32.mrb[0].mxu0
        %v1408 = vpop.f32.mrb[0].mxu0
        %v1409 = vadd.f32 %v385, %v1408
        %v1410 = vpop.f32.mrb[0].mxu0
        %1411 = vmatprep.mubr.bf16.mxu0 %v836
        %1412 = vmatmul.mubr.bf16.gmra.mrb[0].mxu0 %v835
        %v1413 = vpop.f32.mrb[0].mxu0
        %v1414 = vadd.f32 %v385, %v1413
        %v1415 = vpop.f32.mrb[0].mxu0
        %v1416 = vpop.f32.mrb[0].mxu0
        %v1417 = vadd.f32 %v385, %v1416
        %v1418 = vpop.f32.mrb[0].mxu0
        %1419 = vmatprep.mubr.bf16.mxu0 %v838
        %1420 = vmatmul.mubr.bf16.gmra.mrb[0].mxu0 %v837
        %v1421 = vpop.f32.mrb[0].mxu0
        %v1422 = vadd.f32 %v385, %v1421
        %v1423 = vpop.f32.mrb[0].mxu0
        %v1424 = vpop.f32.mrb[0].mxu0
        %v1425 = vadd.f32 %v385, %v1424
        %v1426 = vpop.f32.mrb[0].mxu0
        %1427 = vmatprep.mubr.bf16.mxu0 %v840
        %1428 = vmatmul.mubr.bf16.gmra.mrb[0].mxu0 %v839
        %v1429 = vpop.f32.mrb[0].mxu0
        %v1430 = vadd.f32 %v385, %v1429
        %v1431 = vpop.f32.mrb[0].mxu0
        %v1432 = vpop.f32.mrb[0].mxu0
        %v1433 = vadd.f32 %v385, %v1432
        %v1434 = vpop.f32.mrb[0].mxu0
        %1435 = vmatprep.mubr.bf16.mxu0 %v842
        %1436 = vmatmul.mubr.bf16.gmra.mrb[0].mxu0 %v841
        %v1437 = vpop.f32.mrb[0].mxu0
        %v1438 = vadd.f32 %v385, %v1437
        %v1439 = vpop.f32.mrb[0].mxu0
        %v1440 = vpop.f32.mrb[0].mxu0
        %v1441 = vadd.f32 %v385, %v1440
        %v1442 = vpop.f32.mrb[0].mxu0
        %1443 = vmatprep.mubr.bf16.mxu0 %v844
        %1444 = vmatmul.mubr.bf16.gmra.mrb[0].mxu0 %v843
        %v1445 = vpop.f32.mrb[0].mxu0
        %v1446 = vadd.f32 %v385, %v1445
        %v1447 = vpop.f32.mrb[0].mxu0
        %v1448 = vpop.f32.mrb[0].mxu0
        %v1449 = vadd.f32 %v385, %v1448
        %v1450 = vpop.f32.mrb[0].mxu0
        %1451 = vmatprep.mubr.bf16.mxu0 %v846
        %1452 = vmatmul.mubr.bf16.gmra.mrb[0].mxu0 %v845
        %v1453 = vpop.f32.mrb[0].mxu0
        %v1454 = vadd.f32 %v385, %v1453
        %v1455 = vpop.f32.mrb[0].mxu0
        %v1456 = vpop.f32.mrb[0].mxu0
        %v1457 = vadd.f32 %v385, %v1456
        %v1458 = vpop.f32.mrb[0].mxu0
        %1459 = vmatprep.mubr.bf16.mxu0 %v848
        %1460 = vmatmul.mubr.bf16.gmra.mrb[0].mxu0 %v847
        %v1461 = vpop.f32.mrb[0].mxu0
        %v1462 = vadd.f32 %v385, %v1461
        %v1463 = vpop.f32.mrb[0].mxu0
        %v1464 = vpop.f32.mrb[0].mxu0
        %v1465 = vadd.f32 %v385, %v1464
        %v1466 = vpop.f32.mrb[0].mxu0
        %1467 = vmatprep.mubr.bf16.mxu0 %v850
        %1468 = vmatmul.mubr.bf16.gmra.mrb[0].mxu0 %v849
        %v1469 = vpop.f32.mrb[0].mxu0
        %v1470 = vadd.f32 %v385, %v1469
        %v1471 = vpop.f32.mrb[0].mxu0
        %v1472 = vpop.f32.mrb[0].mxu0
        %v1473 = vadd.f32 %v385, %v1472
        %v1474 = vpop.f32.mrb[0].mxu0
        %1475 = vmatprep.mubr.bf16.mxu0 %v852
        %1476 = vmatmul.mubr.bf16.gmra.mrb[0].mxu0 %v851
        %v1477 = vpop.f32.mrb[0].mxu0
        %v1478 = vadd.f32 %v385, %v1477
        %v1479 = vpop.f32.mrb[0].mxu0
        %v1480 = vpop.f32.mrb[0].mxu0
        %v1481 = vadd.f32 %v385, %v1480
        %v1482 = vpop.f32.mrb[0].mxu0
        %1483 = vmatprep.mubr.bf16.mxu0 %v854
        %1484 = vmatmul.mubr.bf16.gmra.mrb[0].mxu0 %v853
        %v1485 = vpop.f32.mrb[0].mxu0
        %v1486 = vadd.f32 %v385, %v1485
        %v1487 = vpop.f32.mrb[0].mxu0
        %v1488 = vpop.f32.mrb[0].mxu0
        %v1489 = vadd.f32 %v385, %v1488
        %v1490 = vpop.f32.mrb[0].mxu0
        %1491 = vmatprep.mubr.bf16.mxu0 %v856
        %1492 = vmatmul.mubr.bf16.gmra.mrb[0].mxu0 %v855
        %v1493 = vpop.f32.mrb[0].mxu0
        %v1494 = vadd.f32 %v385, %v1493
        %v1495 = vpop.f32.mrb[0].mxu0
        %v1496 = vpop.f32.mrb[0].mxu0
        %v1497 = vadd.f32 %v385, %v1496
        %v1498 = vpop.f32.mrb[0].mxu0
        %1499 = vmatprep.mubr.bf16.mxu0 %v858
        %1500 = vmatmul.mubr.bf16.gmra.mrb[0].mxu0 %v857
        %v1501 = vpop.f32.mrb[0].mxu0
        %v1502 = vadd.f32 %v385, %v1501
        %v1503 = vpop.f32.mrb[0].mxu0
        %v1504 = vpop.f32.mrb[0].mxu0
        %v1505 = vadd.f32 %v385, %v1504
        %v1506 = vpop.f32.mrb[0].mxu0
        %1507 = vmatprep.mubr.bf16.mxu0 %v860
        %1508 = vmatmul.mubr.bf16.gmra.mrb[0].mxu0 %v859
        %v1509 = vpop.f32.mrb[0].mxu0
        %v1510 = vadd.f32 %v385, %v1509
        %v1511 = vpop.f32.mrb[0].mxu0
        %v1512 = vpop.f32.mrb[0].mxu0
        %v1513 = vadd.f32 %v385, %v1512
        %v1514 = vpop.f32.mrb[0].mxu0
        %1515 = vmatprep.mubr.bf16.mxu0 %v862
        %1516 = vmatmul.mubr.bf16.gmra.mrb[0].mxu0 %v861
        %v1517 = vpop.f32.mrb[0].mxu0
        %v1518 = vadd.f32 %v385, %v1517
        %v1519 = vpop.f32.mrb[0].mxu0
        %v1520 = vpop.f32.mrb[0].mxu0
        %v1521 = vadd.f32 %v385, %v1520
        %v1522 = vpop.f32.mrb[0].mxu0
        %1523 = vmatprep.mubr.bf16.mxu0 %v864
        %1524 = vmatmul.mubr.bf16.gmra.mrb[0].mxu0 %v863
        %v1525 = vpop.f32.mrb[0].mxu0
        %v1526 = vadd.f32 %v385, %v1525
        %v1527 = vpop.f32.mrb[0].mxu0
        %v1528 = vpop.f32.mrb[0].mxu0
        %v1529 = vadd.f32 %v385, %v1528
        %v1530 = vpop.f32.mrb[0].mxu0
        %1531 = vmatprep.mubr.bf16.mxu0 %v866
        %1532 = vmatmul.mubr.bf16.gmra.mrb[0].mxu0 %v865
        %v1533 = vpop.f32.mrb[0].mxu0
        %v1534 = vadd.f32 %v385, %v1533
        %v1535 = vpop.f32.mrb[0].mxu0
        %v1536 = vpop.f32.mrb[0].mxu0
        %v1537 = vadd.f32 %v385, %v1536
        %v1538 = vpop.f32.mrb[0].mxu0
        %1539 = vmatprep.mubr.bf16.mxu0 %v868
        %1540 = vmatmul.mubr.bf16.gmra.mrb[0].mxu0 %v867
        %v1541 = vpop.f32.mrb[0].mxu0
        %v1542 = vadd.f32 %v385, %v1541
        %v1543 = vpop.f32.mrb[0].mxu0
        %v1544 = vpop.f32.mrb[0].mxu0
        %v1545 = vadd.f32 %v385, %v1544
        %v1546 = vpop.f32.mrb[0].mxu0
        %1547 = vmatprep.mubr.bf16.mxu0 %v870
        %1548 = vmatmul.mubr.bf16.gmra.mrb[0].mxu0 %v869
        %v1549 = vpop.f32.mrb[0].mxu0
        %v1550 = vadd.f32 %v385, %v1549
        %v1551 = vpop.f32.mrb[0].mxu0
        %v1552 = vpop.f32.mrb[0].mxu0
        %v1553 = vadd.f32 %v385, %v1552
        %v1554 = vpop.f32.mrb[0].mxu0
        %1555 = vmatprep.mubr.bf16.mxu0 %v872
        %1556 = vmatmul.mubr.bf16.gmra.mrb[0].mxu0 %v871
        %v1557 = vpop.f32.mrb[0].mxu0
        %v1558 = vadd.f32 %v385, %v1557
        %v1559 = vpop.f32.mrb[0].mxu0
        %v1560 = vpop.f32.mrb[0].mxu0
        %v1561 = vadd.f32 %v385, %v1560
        %v1562 = vpop.f32.mrb[0].mxu0
        %1563 = vmatprep.mubr.bf16.mxu0 %v874
        %1564 = vmatmul.mubr.bf16.gmra.mrb[0].mxu0 %v873
        %v1565 = vpop.f32.mrb[0].mxu0
        %v1566 = vadd.f32 %v385, %v1565
        %v1567 = vpop.f32.mrb[0].mxu0
        %v1568 = vpop.f32.mrb[0].mxu0
        %v1569 = vadd.f32 %v385, %v1568
        %v1570 = vpop.f32.mrb[0].mxu0
        %1571 = vmatprep.mubr.bf16.mxu0 %v876
        %1572 = vmatmul.mubr.bf16.gmra.mrb[0].mxu0 %v875
        %v1573 = vpop.f32.mrb[0].mxu0
        %v1574 = vadd.f32 %v385, %v1573
        %v1575 = vpop.f32.mrb[0].mxu0
        %v1576 = vpop.f32.mrb[0].mxu0
        %v1577 = vadd.f32 %v385, %v1576
        %v1578 = vpop.f32.mrb[0].mxu0
        %1579 = vmatprep.mubr.bf16.mxu0 %v878
        %1580 = vmatmul.mubr.bf16.gmra.mrb[0].mxu0 %v877
        %v1581 = vpop.f32.mrb[0].mxu0
        %v1582 = vadd.f32 %v385, %v1581
        %v1583 = vpop.f32.mrb[0].mxu0
        %v1584 = vpop.f32.mrb[0].mxu0
        %v1585 = vadd.f32 %v385, %v1584
        %v1586 = vpop.f32.mrb[0].mxu0
        %1587 = vmatprep.mubr.bf16.mxu0 %v880
        %1588 = vmatmul.mubr.bf16.gmra.mrb[0].mxu0 %v879
        %v1589 = vpop.f32.mrb[0].mxu0
        %v1590 = vadd.f32 %v385, %v1589
        %v1591 = vpop.f32.mrb[0].mxu0
        %v1592 = vpop.f32.mrb[0].mxu0
        %v1593 = vadd.f32 %v385, %v1592
        %v1594 = vpop.f32.mrb[0].mxu0
        %1595 = vmatprep.mubr.bf16.mxu0 %v882
        %1596 = vmatmul.mubr.bf16.gmra.mrb[0].mxu0 %v881
        %v1597 = vpop.f32.mrb[0].mxu0
        %v1598 = vadd.f32 %v385, %v1597
        %v1599 = vpop.f32.mrb[0].mxu0
        %v1600 = vpop.f32.mrb[0].mxu0
        %v1601 = vadd.f32 %v385, %v1600
        %v1602 = vpop.f32.mrb[0].mxu0
        %1603 = vmatprep.mubr.bf16.mxu0 %v884
        %1604 = vmatmul.mubr.bf16.gmra.mrb[0].mxu0 %v883
        %v1605 = vpop.f32.mrb[0].mxu0
        %v1606 = vadd.f32 %v385, %v1605
        %v1607 = vpop.f32.mrb[0].mxu0
        %v1608 = vpop.f32.mrb[0].mxu0
        %v1609 = vadd.f32 %v385, %v1608
        %v1610 = vpop.f32.mrb[0].mxu0
        %1611 = vmatprep.mubr.bf16.mxu0 %v886
        %1612 = vmatmul.mubr.bf16.gmra.mrb[0].mxu0 %v885
        %v1613 = vpop.f32.mrb[0].mxu0
        %v1614 = vadd.f32 %v385, %v1613
        %v1615 = vpop.f32.mrb[0].mxu0
        %v1616 = vpop.f32.mrb[0].mxu0
        %v1617 = vadd.f32 %v385, %v1616
        %v1618 = vpop.f32.mrb[0].mxu0
        %1619 = vmatprep.mubr.bf16.mxu0 %v888
        %1620 = vmatmul.mubr.bf16.gmra.mrb[0].mxu0 %v887
        %v1621 = vpop.f32.mrb[0].mxu0
        %v1622 = vadd.f32 %v385, %v1621
        %v1623 = vpop.f32.mrb[0].mxu0
        %v1624 = vpop.f32.mrb[0].mxu0
        %v1625 = vadd.f32 %v385, %v1624
        %v1626 = vpop.f32.mrb[0].mxu0
        %1627 = vmatprep.mubr.bf16.mxu0 %v890
        %1628 = vmatmul.mubr.bf16.gmra.mrb[0].mxu0 %v889
        %v1629 = vpop.f32.mrb[0].mxu0
        %v1630 = vadd.f32 %v385, %v1629
        %v1631 = vpop.f32.mrb[0].mxu0
        %v1632 = vpop.f32.mrb[0].mxu0
        %v1633 = vadd.f32 %v385, %v1632
        %v1634 = vpop.f32.mrb[0].mxu0
        %1635 = vmatprep.mubr.bf16.mxu0 %v892
        %1636 = vmatmul.mubr.bf16.gmra.mrb[0].mxu0 %v891
        %v1637 = vpop.f32.mrb[0].mxu0
        %v1638 = vadd.f32 %v385, %v1637
        %v1639 = vpop.f32.mrb[0].mxu0
        %v1640 = vpop.f32.mrb[0].mxu0
        %v1641 = vadd.f32 %v385, %v1640
        %v1642 = vpop.f32.mrb[0].mxu0
        %1643 = vmatprep.mubr.bf16.mxu0 %v894
        %1644 = vmatmul.mubr.bf16.gmra.mrb[0].mxu0 %v893
        %v1645 = vpop.f32.mrb[0].mxu0
        %v1646 = vadd.f32 %v385, %v1645
        %v1647 = vpop.f32.mrb[0].mxu0
        %v1648 = vpop.f32.mrb[0].mxu0
        %v1649 = vadd.f32 %v385, %v1648
        %v1650 = vpop.f32.mrb[0].mxu0
        %1651 = vmatprep.mubr.bf16.mxu0 %v896
        %1652 = vmatmul.mubr.bf16.gmra.mrb[0].mxu0 %v895
        %v1653 = vpop.f32.mrb[0].mxu0
        %v1654 = vadd.f32 %v385, %v1653
        %v1655 = vpop.f32.mrb[0].mxu0
        %v1656 = vpop.f32.mrb[0].mxu0
        %v1657 = vadd.f32 %v385, %v1656
        %v1658 = vpop.f32.mrb[0].mxu0
        %1659 = vmatprep.mubr.bf16.mxu0 %v898
        %1660 = vmatmul.mubr.bf16.gmra.mrb[0].mxu0 %v897
        %v1661 = vpop.f32.mrb[0].mxu0
        %v1662 = vadd.f32 %v385, %v1661
        %v1663 = vpop.f32.mrb[0].mxu0
        %v1664 = vpop.f32.mrb[0].mxu0
        %v1665 = vadd.f32 %v385, %v1664
        %v1666 = vpop.f32.mrb[0].mxu0
        %1667 = vdwg.mxu0
        %v1668 = vmax.f32 %v1158, 0.0
        %v1669 = vmax.f32 %v1161, 0.0
        %v1670 = vmax.f32 %v1166, 0.0
        %v1671 = vmax.f32 %v1169, 0.0
        %v1672 = vmax.f32 %v1174, 0.0
        %v1673 = vmax.f32 %v1177, 0.0
        %v1674 = vmax.f32 %v1182, 0.0
        %v1675 = vmax.f32 %v1185, 0.0
        %v1676 = vmax.f32 %v1190, 0.0
        %v1677 = vmax.f32 %v1193, 0.0
        %v1678 = vmax.f32 %v1198, 0.0
        %v1679 = vmax.f32 %v1201, 0.0
        %v1680 = vmax.f32 %v1206, 0.0
        %v1681 = vmax.f32 %v1209, 0.0
        %v1682 = vmax.f32 %v1214, 0.0
        %v1683 = vmax.f32 %v1217, 0.0
        %v1684 = vmax.f32 %v1222, 0.0
        %v1685 = vmax.f32 %v1225, 0.0
        %v1686 = vmax.f32 %v1230, 0.0
        %v1687 = vmax.f32 %v1233, 0.0
        %v1688 = vmax.f32 %v1238, 0.0
        %v1689 = vmax.f32 %v1241, 0.0
        %v1690 = vmax.f32 %v1246, 0.0
        %v1691 = vmax.f32 %v1249, 0.0
        %v1692 = vmax.f32 %v1254, 0.0
        %v1693 = vmax.f32 %v1257, 0.0
        %v1694 = vmax.f32 %v1262, 0.0
        %v1695 = vmax.f32 %v1265, 0.0
        %v1696 = vmax.f32 %v1270, 0.0
        %v1697 = vmax.f32 %v1273, 0.0
        %v1698 = vmax.f32 %v1278, 0.0
        %v1699 = vmax.f32 %v1281, 0.0
        %v1700 = vmax.f32 %v1286, 0.0
        %v1701 = vmax.f32 %v1289, 0.0
        %v1702 = vmax.f32 %v1294, 0.0
        %v1703 = vmax.f32 %v1297, 0.0
        %v1704 = vmax.f32 %v1302, 0.0
        %v1705 = vmax.f32 %v1305, 0.0
        %v1706 = vmax.f32 %v1310, 0.0
        %v1707 = vmax.f32 %v1313, 0.0
        %v1708 = vmax.f32 %v1318, 0.0
        %v1709 = vmax.f32 %v1321, 0.0
        %v1710 = vmax.f32 %v1326, 0.0
        %v1711 = vmax.f32 %v1329, 0.0
        %v1712 = vmax.f32 %v1334, 0.0
        %v1713 = vmax.f32 %v1337, 0.0
        %v1714 = vmax.f32 %v1342, 0.0
        %v1715 = vmax.f32 %v1345, 0.0
        %v1716 = vmax.f32 %v1350, 0.0
        %v1717 = vmax.f32 %v1353, 0.0
        %v1718 = vmax.f32 %v1358, 0.0
        %v1719 = vmax.f32 %v1361, 0.0
        %v1720 = vmax.f32 %v1366, 0.0
        %v1721 = vmax.f32 %v1369, 0.0
        %v1722 = vmax.f32 %v1374, 0.0
        %v1723 = vmax.f32 %v1377, 0.0
        %v1724 = vmax.f32 %v1382, 0.0
        %v1725 = vmax.f32 %v1385, 0.0
        %v1726 = vmax.f32 %v1390, 0.0
        %v1727 = vmax.f32 %v1393, 0.0
        %v1728 = vmax.f32 %v1398, 0.0
        %v1729 = vmax.f32 %v1401, 0.0
        %v1730 = vmax.f32 %v1406, 0.0
        %v1731 = vmax.f32 %v1409, 0.0
        %v1732 = vmax.f32 %v1414, 0.0
        %v1733 = vmax.f32 %v1417, 0.0
        %v1734 = vmax.f32 %v1422, 0.0
        %v1735 = vmax.f32 %v1425, 0.0
        %v1736 = vmax.f32 %v1430, 0.0
        %v1737 = vmax.f32 %v1433, 0.0
        %v1738 = vmax.f32 %v1438, 0.0
        %v1739 = vmax.f32 %v1441, 0.0
        %v1740 = vmax.f32 %v1446, 0.0
        %v1741 = vmax.f32 %v1449, 0.0
        %v1742 = vmax.f32 %v1454, 0.0
        %v1743 = vmax.f32 %v1457, 0.0
        %v1744 = vmax.f32 %v1462, 0.0
        %v1745 = vmax.f32 %v1465, 0.0
        %v1746 = vmax.f32 %v1470, 0.0
        %v1747 = vmax.f32 %v1473, 0.0
        %v1748 = vmax.f32 %v1478, 0.0
        %v1749 = vmax.f32 %v1481, 0.0
        %v1750 = vmax.f32 %v1486, 0.0
        %v1751 = vmax.f32 %v1489, 0.0
        %v1752 = vmax.f32 %v1494, 0.0
        %v1753 = vmax.f32 %v1497, 0.0
        %v1754 = vmax.f32 %v1502, 0.0
        %v1755 = vmax.f32 %v1505, 0.0
        %v1756 = vmax.f32 %v1510, 0.0
        %v1757 = vmax.f32 %v1513, 0.0
        %v1758 = vmax.f32 %v1518, 0.0
        %v1759 = vmax.f32 %v1521, 0.0
        %v1760 = vmax.f32 %v1526, 0.0
        %v1761 = vmax.f32 %v1529, 0.0
        %v1762 = vmax.f32 %v1534, 0.0
        %v1763 = vmax.f32 %v1537, 0.0
        %v1764 = vmax.f32 %v1542, 0.0
        %v1765 = vmax.f32 %v1545, 0.0
        %v1766 = vmax.f32 %v1550, 0.0
        %v1767 = vmax.f32 %v1553, 0.0
        %v1768 = vmax.f32 %v1558, 0.0
        %v1769 = vmax.f32 %v1561, 0.0
        %v1770 = vmax.f32 %v1566, 0.0
        %v1771 = vmax.f32 %v1569, 0.0
        %v1772 = vmax.f32 %v1574, 0.0
        %v1773 = vmax.f32 %v1577, 0.0
        %v1774 = vmax.f32 %v1582, 0.0
        %v1775 = vmax.f32 %v1585, 0.0
        %v1776 = vmax.f32 %v1590, 0.0
        %v1777 = vmax.f32 %v1593, 0.0
        %v1778 = vmax.f32 %v1598, 0.0
        %v1779 = vmax.f32 %v1601, 0.0
        %v1780 = vmax.f32 %v1606, 0.0
        %v1781 = vmax.f32 %v1609, 0.0
        %v1782 = vmax.f32 %v1614, 0.0
        %v1783 = vmax.f32 %v1617, 0.0
        %v1784 = vmax.f32 %v1622, 0.0
        %v1785 = vmax.f32 %v1625, 0.0
        %v1786 = vmax.f32 %v1630, 0.0
        %v1787 = vmax.f32 %v1633, 0.0
        %v1788 = vmax.f32 %v1638, 0.0
        %v1789 = vmax.f32 %v1641, 0.0
        %v1790 = vmax.f32 %v1646, 0.0
        %v1791 = vmax.f32 %v1649, 0.0
        %v1792 = vmax.f32 %v1654, 0.0
        %v1793 = vmax.f32 %v1657, 0.0
        %v1794 = vmax.f32 %v1662, 0.0
        %v1795 = vmax.f32 %v1665, 0.0
        %v1796 = vpack.c.bf16 %v1669, %v1668
        %v1797 = vpack.c.bf16 %v1671, %v1670
        %v1798 = vpack.c.bf16 %v1673, %v1672
        %v1799 = vpack.c.bf16 %v1675, %v1674
        %v1800 = vpack.c.bf16 %v1677, %v1676
        %v1801 = vpack.c.bf16 %v1679, %v1678
        %v1802 = vpack.c.bf16 %v1681, %v1680
        %v1803 = vpack.c.bf16 %v1683, %v1682
        %v1804 = vpack.c.bf16 %v1685, %v1684
        %v1805 = vpack.c.bf16 %v1687, %v1686
        %v1806 = vpack.c.bf16 %v1689, %v1688
        %v1807 = vpack.c.bf16 %v1691, %v1690
        %v1808 = vpack.c.bf16 %v1693, %v1692
        %v1809 = vpack.c.bf16 %v1695, %v1694
        %v1810 = vpack.c.bf16 %v1697, %v1696
        %v1811 = vpack.c.bf16 %v1699, %v1698
        %v1812 = vpack.c.bf16 %v1701, %v1700
        %v1813 = vpack.c.bf16 %v1703, %v1702
        %v1814 = vpack.c.bf16 %v1705, %v1704
        %v1815 = vpack.c.bf16 %v1707, %v1706
        %v1816 = vpack.c.bf16 %v1709, %v1708
        %v1817 = vpack.c.bf16 %v1711, %v1710
        %v1818 = vpack.c.bf16 %v1713, %v1712
        %v1819 = vpack.c.bf16 %v1715, %v1714
        %v1820 = vpack.c.bf16 %v1717, %v1716
        %v1821 = vpack.c.bf16 %v1719, %v1718
        %v1822 = vpack.c.bf16 %v1721, %v1720
        %v1823 = vpack.c.bf16 %v1723, %v1722
        %v1824 = vpack.c.bf16 %v1725, %v1724
        %v1825 = vpack.c.bf16 %v1727, %v1726
        %v1826 = vpack.c.bf16 %v1729, %v1728
        %v1827 = vpack.c.bf16 %v1731, %v1730
        %v1828 = vpack.c.bf16 %v1733, %v1732
        %v1829 = vpack.c.bf16 %v1735, %v1734
        %v1830 = vpack.c.bf16 %v1737, %v1736
        %v1831 = vpack.c.bf16 %v1739, %v1738
        %v1832 = vpack.c.bf16 %v1741, %v1740
        %v1833 = vpack.c.bf16 %v1743, %v1742
        %v1834 = vpack.c.bf16 %v1745, %v1744
        %v1835 = vpack.c.bf16 %v1747, %v1746
        %v1836 = vpack.c.bf16 %v1749, %v1748
        %v1837 = vpack.c.bf16 %v1751, %v1750
        %v1838 = vpack.c.bf16 %v1753, %v1752
        %v1839 = vpack.c.bf16 %v1755, %v1754
        %v1840 = vpack.c.bf16 %v1757, %v1756
        %v1841 = vpack.c.bf16 %v1759, %v1758
        %v1842 = vpack.c.bf16 %v1761, %v1760
        %v1843 = vpack.c.bf16 %v1763, %v1762
        %v1844 = vpack.c.bf16 %v1765, %v1764
        %v1845 = vpack.c.bf16 %v1767, %v1766
        %v1846 = vpack.c.bf16 %v1769, %v1768
        %v1847 = vpack.c.bf16 %v1771, %v1770
        %v1848 = vpack.c.bf16 %v1773, %v1772
        %v1849 = vpack.c.bf16 %v1775, %v1774
        %v1850 = vpack.c.bf16 %v1777, %v1776
        %v1851 = vpack.c.bf16 %v1779, %v1778
        %v1852 = vpack.c.bf16 %v1781, %v1780
        %v1853 = vpack.c.bf16 %v1783, %v1782
        %v1854 = vpack.c.bf16 %v1785, %v1784
        %v1855 = vpack.c.bf16 %v1787, %v1786
        %v1856 = vpack.c.bf16 %v1789, %v1788
        %v1857 = vpack.c.bf16 %v1791, %v1790
        %v1858 = vpack.c.bf16 %v1793, %v1792
        %v1859 = vpack.c.bf16 %v1795, %v1794
        %v1924 = vunpack.c.l.b16 %v1796
        %v1925 = vunpack.c.h.b16 %v1796
        %v1926 = vunpack.c.l.b16 %v1797
        %v1927 = vunpack.c.h.b16 %v1797
        %v1928 = vunpack.c.l.b16 %v1798
        %v1929 = vunpack.c.h.b16 %v1798
        %v1930 = vunpack.c.l.b16 %v1799
        %v1931 = vunpack.c.h.b16 %v1799
        %v1932 = vunpack.c.l.b16 %v1800
        %v1933 = vunpack.c.h.b16 %v1800
        %v1934 = vunpack.c.l.b16 %v1801
        %v1935 = vunpack.c.h.b16 %v1801
        %v1936 = vunpack.c.l.b16 %v1802
        %v1937 = vunpack.c.h.b16 %v1802
        %v1938 = vunpack.c.l.b16 %v1803
        %v1939 = vunpack.c.h.b16 %v1803
        %v1940 = vunpack.c.l.b16 %v1804
        %v1941 = vunpack.c.h.b16 %v1804
        %v1942 = vunpack.c.l.b16 %v1805
        %v1943 = vunpack.c.h.b16 %v1805
        %v1944 = vunpack.c.l.b16 %v1806
        %v1945 = vunpack.c.h.b16 %v1806
        %v1946 = vunpack.c.l.b16 %v1807
        %v1947 = vunpack.c.h.b16 %v1807
        %v1948 = vunpack.c.l.b16 %v1808
        %v1949 = vunpack.c.h.b16 %v1808
        %v1950 = vunpack.c.l.b16 %v1809
        %v1951 = vunpack.c.h.b16 %v1809
        %v1952 = vunpack.c.l.b16 %v1810
        %v1953 = vunpack.c.h.b16 %v1810
        %v1954 = vunpack.c.l.b16 %v1811
        %v1955 = vunpack.c.h.b16 %v1811
        %v1956 = vunpack.c.l.b16 %v1812
        %v1957 = vunpack.c.h.b16 %v1812
        %v1958 = vunpack.c.l.b16 %v1813
        %v1959 = vunpack.c.h.b16 %v1813
        %v1960 = vunpack.c.l.b16 %v1814
        %v1961 = vunpack.c.h.b16 %v1814
        %v1962 = vunpack.c.l.b16 %v1815
        %v1963 = vunpack.c.h.b16 %v1815
        %v1964 = vunpack.c.l.b16 %v1816
        %v1965 = vunpack.c.h.b16 %v1816
        %v1966 = vunpack.c.l.b16 %v1817
        %v1967 = vunpack.c.h.b16 %v1817
        %v1968 = vunpack.c.l.b16 %v1818
        %v1969 = vunpack.c.h.b16 %v1818
        %v1970 = vunpack.c.l.b16 %v1819
        %v1971 = vunpack.c.h.b16 %v1819
        %v1972 = vunpack.c.l.b16 %v1820
        %v1973 = vunpack.c.h.b16 %v1820
        %v1974 = vunpack.c.l.b16 %v1821
        %v1975 = vunpack.c.h.b16 %v1821
        %v1976 = vunpack.c.l.b16 %v1822
        %v1977 = vunpack.c.h.b16 %v1822
        %v1978 = vunpack.c.l.b16 %v1823
        %v1979 = vunpack.c.h.b16 %v1823
        %v1980 = vunpack.c.l.b16 %v1824
        %v1981 = vunpack.c.h.b16 %v1824
        %v1982 = vunpack.c.l.b16 %v1825
        %v1983 = vunpack.c.h.b16 %v1825
        %v1984 = vunpack.c.l.b16 %v1826
        %v1985 = vunpack.c.h.b16 %v1826
        %v1986 = vunpack.c.l.b16 %v1827
        %v1987 = vunpack.c.h.b16 %v1827
        %v1988 = vunpack.c.l.b16 %v1828
        %v1989 = vunpack.c.h.b16 %v1828
        %v1990 = vunpack.c.l.b16 %v1829
        %v1991 = vunpack.c.h.b16 %v1829
        %v1992 = vunpack.c.l.b16 %v1830
        %v1993 = vunpack.c.h.b16 %v1830
        %v1994 = vunpack.c.l.b16 %v1831
        %v1995 = vunpack.c.h.b16 %v1831
        %v1996 = vunpack.c.l.b16 %v1832
        %v1997 = vunpack.c.h.b16 %v1832
        %v1998 = vunpack.c.l.b16 %v1833
        %v1999 = vunpack.c.h.b16 %v1833
        %v2000 = vunpack.c.l.b16 %v1834
        %v2001 = vunpack.c.h.b16 %v1834
        %v2002 = vunpack.c.l.b16 %v1835
        %v2003 = vunpack.c.h.b16 %v1835
        %v2004 = vunpack.c.l.b16 %v1836
        %v2005 = vunpack.c.h.b16 %v1836
        %v2006 = vunpack.c.l.b16 %v1837
        %v2007 = vunpack.c.h.b16 %v1837
        %v2008 = vunpack.c.l.b16 %v1838
        %v2009 = vunpack.c.h.b16 %v1838
        %v2010 = vunpack.c.l.b16 %v1839
        %v2011 = vunpack.c.h.b16 %v1839
        %v2012 = vunpack.c.l.b16 %v1840
        %v2013 = vunpack.c.h.b16 %v1840
        %v2014 = vunpack.c.l.b16 %v1841
        %v2015 = vunpack.c.h.b16 %v1841
        %v2016 = vunpack.c.l.b16 %v1842
        %v2017 = vunpack.c.h.b16 %v1842
        %v2018 = vunpack.c.l.b16 %v1843
        %v2019 = vunpack.c.h.b16 %v1843
        %v2020 = vunpack.c.l.b16 %v1844
        %v2021 = vunpack.c.h.b16 %v1844
        %v2022 = vunpack.c.l.b16 %v1845
        %v2023 = vunpack.c.h.b16 %v1845
        %v2024 = vunpack.c.l.b16 %v1846
        %v2025 = vunpack.c.h.b16 %v1846
        %v2026 = vunpack.c.l.b16 %v1847
        %v2027 = vunpack.c.h.b16 %v1847
        %v2028 = vunpack.c.l.b16 %v1848
        %v2029 = vunpack.c.h.b16 %v1848
        %v2030 = vunpack.c.l.b16 %v1849
        %v2031 = vunpack.c.h.b16 %v1849
        %v2032 = vunpack.c.l.b16 %v1850
        %v2033 = vunpack.c.h.b16 %v1850
        %v2034 = vunpack.c.l.b16 %v1851
        %v2035 = vunpack.c.h.b16 %v1851
        %v2036 = vunpack.c.l.b16 %v1852
        %v2037 = vunpack.c.h.b16 %v1852
        %v2038 = vunpack.c.l.b16 %v1853
        %v2039 = vunpack.c.h.b16 %v1853
        %v2040 = vunpack.c.l.b16 %v1854
        %v2041 = vunpack.c.h.b16 %v1854
        %v2042 = vunpack.c.l.b16 %v1855
        %v2043 = vunpack.c.h.b16 %v1855
        %v2044 = vunpack.c.l.b16 %v1856
        %v2045 = vunpack.c.h.b16 %v1856
        %v2046 = vunpack.c.l.b16 %v1857
        %v2047 = vunpack.c.h.b16 %v1857
        %v2048 = vunpack.c.l.b16 %v1858
        %v2049 = vunpack.c.h.b16 %v1858
        %v2050 = vunpack.c.l.b16 %v1859
        %v2051 = vunpack.c.h.b16 %v1859
        %v2052 = vpack.c.b16 %v1924, %v1924
        %v2053 = vpack.c.b16 %v1925, %v1925
        %v2054 = vpack.c.b16 %v1926, %v1926
        %v2055 = vpack.c.b16 %v1927, %v1927
        %v2056 = vpack.c.b16 %v1928, %v1928
        %v2057 = vpack.c.b16 %v1929, %v1929
        %v2058 = vpack.c.b16 %v1930, %v1930
        %v2059 = vpack.c.b16 %v1931, %v1931
        %v2060 = vpack.c.b16 %v1932, %v1932
        %v2061 = vpack.c.b16 %v1933, %v1933
        %v2062 = vpack.c.b16 %v1934, %v1934
        %v2063 = vpack.c.b16 %v1935, %v1935
        %v2064 = vpack.c.b16 %v1936, %v1936
        %v2065 = vpack.c.b16 %v1937, %v1937
        %v2066 = vpack.c.b16 %v1938, %v1938
        %v2067 = vpack.c.b16 %v1939, %v1939
        %v2068 = vpack.c.b16 %v1940, %v1940
        %v2069 = vpack.c.b16 %v1941, %v1941
        %v2070 = vpack.c.b16 %v1942, %v1942
        %v2071 = vpack.c.b16 %v1943, %v1943
        %v2072 = vpack.c.b16 %v1944, %v1944
        %v2073 = vpack.c.b16 %v1945, %v1945
        %v2074 = vpack.c.b16 %v1946, %v1946
        %v2075 = vpack.c.b16 %v1947, %v1947
        %v2076 = vpack.c.b16 %v1948, %v1948
        %v2077 = vpack.c.b16 %v1949, %v1949
        %v2078 = vpack.c.b16 %v1950, %v1950
        %v2079 = vpack.c.b16 %v1951, %v1951
        %v2080 = vpack.c.b16 %v1952, %v1952
        %v2081 = vpack.c.b16 %v1953, %v1953
        %v2082 = vpack.c.b16 %v1954, %v1954
        %v2083 = vpack.c.b16 %v1955, %v1955
        %v2084 = vpack.c.b16 %v1956, %v1956
        %v2085 = vpack.c.b16 %v1957, %v1957
        %v2086 = vpack.c.b16 %v1958, %v1958
        %v2087 = vpack.c.b16 %v1959, %v1959
        %v2088 = vpack.c.b16 %v1960, %v1960
        %v2089 = vpack.c.b16 %v1961, %v1961
        %v2090 = vpack.c.b16 %v1962, %v1962
        %v2091 = vpack.c.b16 %v1963, %v1963
        %v2092 = vpack.c.b16 %v1964, %v1964
        %v2093 = vpack.c.b16 %v1965, %v1965
        %v2094 = vpack.c.b16 %v1966, %v1966
        %v2095 = vpack.c.b16 %v1967, %v1967
        %v2096 = vpack.c.b16 %v1968, %v1968
        %v2097 = vpack.c.b16 %v1969, %v1969
        %v2098 = vpack.c.b16 %v1970, %v1970
        %v2099 = vpack.c.b16 %v1971, %v1971
        %v2100 = vpack.c.b16 %v1972, %v1972
        %v2101 = vpack.c.b16 %v1973, %v1973
        %v2102 = vpack.c.b16 %v1974, %v1974
        %v2103 = vpack.c.b16 %v1975, %v1975
        %v2104 = vpack.c.b16 %v1976, %v1976
        %v2105 = vpack.c.b16 %v1977, %v1977
        %v2106 = vpack.c.b16 %v1978, %v1978
        %v2107 = vpack.c.b16 %v1979, %v1979
        %v2108 = vpack.c.b16 %v1980, %v1980
        %v2109 = vpack.c.b16 %v1981, %v1981
        %v2110 = vpack.c.b16 %v1982, %v1982
        %v2111 = vpack.c.b16 %v1983, %v1983
        %v2112 = vpack.c.b16 %v1984, %v1984
        %v2113 = vpack.c.b16 %v1985, %v1985
        %v2114 = vpack.c.b16 %v1986, %v1986
        %v2115 = vpack.c.b16 %v1987, %v1987
        %v2116 = vpack.c.b16 %v1988, %v1988
        %v2117 = vpack.c.b16 %v1989, %v1989
        %v2118 = vpack.c.b16 %v1990, %v1990
        %v2119 = vpack.c.b16 %v1991, %v1991
        %v2120 = vpack.c.b16 %v1992, %v1992
        %v2121 = vpack.c.b16 %v1993, %v1993
        %v2122 = vpack.c.b16 %v1994, %v1994
        %v2123 = vpack.c.b16 %v1995, %v1995
        %v2124 = vpack.c.b16 %v1996, %v1996
        %v2125 = vpack.c.b16 %v1997, %v1997
        %v2126 = vpack.c.b16 %v1998, %v1998
        %v2127 = vpack.c.b16 %v1999, %v1999
        %v2128 = vpack.c.b16 %v2000, %v2000
        %v2129 = vpack.c.b16 %v2001, %v2001
        %v2130 = vpack.c.b16 %v2002, %v2002
        %v2131 = vpack.c.b16 %v2003, %v2003
        %v2132 = vpack.c.b16 %v2004, %v2004
        %v2133 = vpack.c.b16 %v2005, %v2005
        %v2134 = vpack.c.b16 %v2006, %v2006
        %v2135 = vpack.c.b16 %v2007, %v2007
        %v2136 = vpack.c.b16 %v2008, %v2008
        %v2137 = vpack.c.b16 %v2009, %v2009
        %v2138 = vpack.c.b16 %v2010, %v2010
        %v2139 = vpack.c.b16 %v2011, %v2011
        %v2140 = vpack.c.b16 %v2012, %v2012
        %v2141 = vpack.c.b16 %v2013, %v2013
        %v2142 = vpack.c.b16 %v2014, %v2014
        %v2143 = vpack.c.b16 %v2015, %v2015
        %v2144 = vpack.c.b16 %v2016, %v2016
        %v2145 = vpack.c.b16 %v2017, %v2017
        %v2146 = vpack.c.b16 %v2018, %v2018
        %v2147 = vpack.c.b16 %v2019, %v2019
        %v2148 = vpack.c.b16 %v2020, %v2020
        %v2149 = vpack.c.b16 %v2021, %v2021
        %v2150 = vpack.c.b16 %v2022, %v2022
        %v2151 = vpack.c.b16 %v2023, %v2023
        %v2152 = vpack.c.b16 %v2024, %v2024
        %v2153 = vpack.c.b16 %v2025, %v2025
        %v2154 = vpack.c.b16 %v2026, %v2026
        %v2155 = vpack.c.b16 %v2027, %v2027
        %v2156 = vpack.c.b16 %v2028, %v2028
        %v2157 = vpack.c.b16 %v2029, %v2029
        %v2158 = vpack.c.b16 %v2030, %v2030
        %v2159 = vpack.c.b16 %v2031, %v2031
        %v2160 = vpack.c.b16 %v2032, %v2032
        %v2161 = vpack.c.b16 %v2033, %v2033
        %v2162 = vpack.c.b16 %v2034, %v2034
        %v2163 = vpack.c.b16 %v2035, %v2035
        %v2164 = vpack.c.b16 %v2036, %v2036
        %v2165 = vpack.c.b16 %v2037, %v2037
        %v2166 = vpack.c.b16 %v2038, %v2038
        %v2167 = vpack.c.b16 %v2039, %v2039
        %v2168 = vpack.c.b16 %v2040, %v2040
        %v2169 = vpack.c.b16 %v2041, %v2041
        %v2170 = vpack.c.b16 %v2042, %v2042
        %v2171 = vpack.c.b16 %v2043, %v2043
        %v2172 = vpack.c.b16 %v2044, %v2044
        %v2173 = vpack.c.b16 %v2045, %v2045
        %v2174 = vpack.c.b16 %v2046, %v2046
        %v2175 = vpack.c.b16 %v2047, %v2047
        %v2176 = vpack.c.b16 %v2048, %v2048
        %v2177 = vpack.c.b16 %v2049, %v2049
        %v2178 = vpack.c.b16 %v2050, %v2050
        %v2179 = vpack.c.b16 %v2051, %v2051
        %2308 = vst [vmem:[%s216] sm:$0xf] %v2052
        %2309 = vst [vmem:[%s216 + $0x4] sm:$0xf] %v2053
        %2310 = vst [vmem:[%s216 + $0x8] sm:$0xf] %v2054
        %2311 = vst [vmem:[%s216 + $0xc] sm:$0xf] %v2055
        %2312 = vst [vmem:[%s216 + $0x10] sm:$0xf] %v2056
        %2313 = vst [vmem:[%s216 + $0x14] sm:$0xf] %v2057
        %2314 = vst [vmem:[%s216 + $0x18] sm:$0xf] %v2058
        %2315 = vst [vmem:[%s216 + $0x1c] sm:$0xf] %v2059
        %2316 = vst [vmem:[%s216 + $0x20] sm:$0xf] %v2060
        %2317 = vst [vmem:[%s216 + $0x24] sm:$0xf] %v2061
        %2318 = vst [vmem:[%s216 + $0x28] sm:$0xf] %v2062
        %2319 = vst [vmem:[%s216 + $0x2c] sm:$0xf] %v2063
        %2320 = vst [vmem:[%s216 + $0x30] sm:$0xf] %v2064
        %2321 = vst [vmem:[%s216 + $0x34] sm:$0xf] %v2065
        %2322 = vst [vmem:[%s216 + $0x38] sm:$0xf] %v2066
        %2323 = vst [vmem:[%s216 + $0x3c] sm:$0xf] %v2067
        %2324 = vst [vmem:[%s216 + $0x40] sm:$0xf] %v2068
        %2325 = vst [vmem:[%s216 + $0x44] sm:$0xf] %v2069
        %2326 = vst [vmem:[%s216 + $0x48] sm:$0xf] %v2070
        %2327 = vst [vmem:[%s216 + $0x4c] sm:$0xf] %v2071
        %2328 = vst [vmem:[%s216 + $0x50] sm:$0xf] %v2072
        %2329 = vst [vmem:[%s216 + $0x54] sm:$0xf] %v2073
        %2330 = vst [vmem:[%s216 + $0x58] sm:$0xf] %v2074
        %2331 = vst [vmem:[%s216 + $0x5c] sm:$0xf] %v2075
        %2332 = vst [vmem:[%s216 + $0x60] sm:$0xf] %v2076
        %2333 = vst [vmem:[%s216 + $0x64] sm:$0xf] %v2077
        %2334 = vst [vmem:[%s216 + $0x68] sm:$0xf] %v2078
        %2335 = vst [vmem:[%s216 + $0x6c] sm:$0xf] %v2079
        %2336 = vst [vmem:[%s216 + $0x70] sm:$0xf] %v2080
        %2337 = vst [vmem:[%s216 + $0x74] sm:$0xf] %v2081
        %2338 = vst [vmem:[%s216 + $0x78] sm:$0xf] %v2082
        %2339 = vst [vmem:[%s216 + $0x7c] sm:$0xf] %v2083
        %2340 = vst [vmem:[%s216 + $0x80] sm:$0xf] %v2084
        %2341 = vst [vmem:[%s216 + $0x84] sm:$0xf] %v2085
        %2342 = vst [vmem:[%s216 + $0x88] sm:$0xf] %v2086
        %2343 = vst [vmem:[%s216 + $0x8c] sm:$0xf] %v2087
        %2344 = vst [vmem:[%s216 + $0x90] sm:$0xf] %v2088
        %2345 = vst [vmem:[%s216 + $0x94] sm:$0xf] %v2089
        %2346 = vst [vmem:[%s216 + $0x98] sm:$0xf] %v2090
        %2347 = vst [vmem:[%s216 + $0x9c] sm:$0xf] %v2091
        %2348 = vst [vmem:[%s216 + $0xa0] sm:$0xf] %v2092
        %2349 = vst [vmem:[%s216 + $0xa4] sm:$0xf] %v2093
        %2350 = vst [vmem:[%s216 + $0xa8] sm:$0xf] %v2094
        %2351 = vst [vmem:[%s216 + $0xac] sm:$0xf] %v2095
        %2352 = vst [vmem:[%s216 + $0xb0] sm:$0xf] %v2096
        %2353 = vst [vmem:[%s216 + $0xb4] sm:$0xf] %v2097
        %2354 = vst [vmem:[%s216 + $0xb8] sm:$0xf] %v2098
        %2355 = vst [vmem:[%s216 + $0xbc] sm:$0xf] %v2099
        %2356 = vst [vmem:[%s216 + $0xc0] sm:$0xf] %v2100
        %2357 = vst [vmem:[%s216 + $0xc4] sm:$0xf] %v2101
        %2358 = vst [vmem:[%s216 + $0xc8] sm:$0xf] %v2102
        %2359 = vst [vmem:[%s216 + $0xcc] sm:$0xf] %v2103
        %2360 = vst [vmem:[%s216 + $0xd0] sm:$0xf] %v2104
        %2361 = vst [vmem:[%s216 + $0xd4] sm:$0xf] %v2105
        %2362 = vst [vmem:[%s216 + $0xd8] sm:$0xf] %v2106
        %2363 = vst [vmem:[%s216 + $0xdc] sm:$0xf] %v2107
        %2364 = vst [vmem:[%s216 + $0xe0] sm:$0xf] %v2108
        %2365 = vst [vmem:[%s216 + $0xe4] sm:$0xf] %v2109
        %2366 = vst [vmem:[%s216 + $0xe8] sm:$0xf] %v2110
        %2367 = vst [vmem:[%s216 + $0xec] sm:$0xf] %v2111
        %2368 = vst [vmem:[%s216 + $0xf0] sm:$0xf] %v2112
        %2369 = vst [vmem:[%s216 + $0xf4] sm:$0xf] %v2113
        %2370 = vst [vmem:[%s216 + $0xf8] sm:$0xf] %v2114
        %2371 = vst [vmem:[%s216 + $0xfc] sm:$0xf] %v2115
        %2372 = vst [vmem:[%s216 + $0x100] sm:$0xf] %v2116
        %2373 = vst [vmem:[%s216 + $0x104] sm:$0xf] %v2117
        %2374 = vst [vmem:[%s216 + $0x108] sm:$0xf] %v2118
        %2375 = vst [vmem:[%s216 + $0x10c] sm:$0xf] %v2119
        %2376 = vst [vmem:[%s216 + $0x110] sm:$0xf] %v2120
        %2377 = vst [vmem:[%s216 + $0x114] sm:$0xf] %v2121
        %2378 = vst [vmem:[%s216 + $0x118] sm:$0xf] %v2122
        %2379 = vst [vmem:[%s216 + $0x11c] sm:$0xf] %v2123
        %2380 = vst [vmem:[%s216 + $0x120] sm:$0xf] %v2124
        %2381 = vst [vmem:[%s216 + $0x124] sm:$0xf] %v2125
        %2382 = vst [vmem:[%s216 + $0x128] sm:$0xf] %v2126
        %2383 = vst [vmem:[%s216 + $0x12c] sm:$0xf] %v2127
        %2384 = vst [vmem:[%s216 + $0x130] sm:$0xf] %v2128
        %2385 = vst [vmem:[%s216 + $0x134] sm:$0xf] %v2129
        %2386 = vst [vmem:[%s216 + $0x138] sm:$0xf] %v2130
        %2387 = vst [vmem:[%s216 + $0x13c] sm:$0xf] %v2131
        %2388 = vst [vmem:[%s216 + $0x140] sm:$0xf] %v2132
        %2389 = vst [vmem:[%s216 + $0x144] sm:$0xf] %v2133
        %2390 = vst [vmem:[%s216 + $0x148] sm:$0xf] %v2134
        %2391 = vst [vmem:[%s216 + $0x14c] sm:$0xf] %v2135
        %2392 = vst [vmem:[%s216 + $0x150] sm:$0xf] %v2136
        %2393 = vst [vmem:[%s216 + $0x154] sm:$0xf] %v2137
        %2394 = vst [vmem:[%s216 + $0x158] sm:$0xf] %v2138
        %2395 = vst [vmem:[%s216 + $0x15c] sm:$0xf] %v2139
        %2396 = vst [vmem:[%s216 + $0x160] sm:$0xf] %v2140
        %2397 = vst [vmem:[%s216 + $0x164] sm:$0xf] %v2141
        %2398 = vst [vmem:[%s216 + $0x168] sm:$0xf] %v2142
        %2399 = vst [vmem:[%s216 + $0x16c] sm:$0xf] %v2143
        %2400 = vst [vmem:[%s216 + $0x170] sm:$0xf] %v2144
        %2401 = vst [vmem:[%s216 + $0x174] sm:$0xf] %v2145
        %2402 = vst [vmem:[%s216 + $0x178] sm:$0xf] %v2146
        %2403 = vst [vmem:[%s216 + $0x17c] sm:$0xf] %v2147
        %2404 = vst [vmem:[%s216 + $0x180] sm:$0xf] %v2148
        %2405 = vst [vmem:[%s216 + $0x184] sm:$0xf] %v2149
        %2406 = vst [vmem:[%s216 + $0x188] sm:$0xf] %v2150
        %2407 = vst [vmem:[%s216 + $0x18c] sm:$0xf] %v2151
        %2408 = vst [vmem:[%s216 + $0x190] sm:$0xf] %v2152
        %2409 = vst [vmem:[%s216 + $0x194] sm:$0xf] %v2153
        %2410 = vst [vmem:[%s216 + $0x198] sm:$0xf] %v2154
        %2411 = vst [vmem:[%s216 + $0x19c] sm:$0xf] %v2155
        %2412 = vst [vmem:[%s216 + $0x1a0] sm:$0xf] %v2156
        %2413 = vst [vmem:[%s216 + $0x1a4] sm:$0xf] %v2157
        %2414 = vst [vmem:[%s216 + $0x1a8] sm:$0xf] %v2158
        %2415 = vst [vmem:[%s216 + $0x1ac] sm:$0xf] %v2159
        %2416 = vst [vmem:[%s216 + $0x1b0] sm:$0xf] %v2160
        %2417 = vst [vmem:[%s216 + $0x1b4] sm:$0xf] %v2161
        %2418 = vst [vmem:[%s216 + $0x1b8] sm:$0xf] %v2162
        %2419 = vst [vmem:[%s216 + $0x1bc] sm:$0xf] %v2163
        %2420 = vst [vmem:[%s216 + $0x1c0] sm:$0xf] %v2164
        %2421 = vst [vmem:[%s216 + $0x1c4] sm:$0xf] %v2165
        %2422 = vst [vmem:[%s216 + $0x1c8] sm:$0xf] %v2166
        %2423 = vst [vmem:[%s216 + $0x1cc] sm:$0xf] %v2167
        %2424 = vst [vmem:[%s216 + $0x1d0] sm:$0xf] %v2168
        %2425 = vst [vmem:[%s216 + $0x1d4] sm:$0xf] %v2169
        %2426 = vst [vmem:[%s216 + $0x1d8] sm:$0xf] %v2170
        %2427 = vst [vmem:[%s216 + $0x1dc] sm:$0xf] %v2171
        %2428 = vst [vmem:[%s216 + $0x1e0] sm:$0xf] %v2172
        %2429 = vst [vmem:[%s216 + $0x1e4] sm:$0xf] %v2173
        %2430 = vst [vmem:[%s216 + $0x1e8] sm:$0xf] %v2174
        %2431 = vst [vmem:[%s216 + $0x1ec] sm:$0xf] %v2175
        %2432 = vst [vmem:[%s216 + $0x1f0] sm:$0xf] %v2176
        %2433 = vst [vmem:[%s216 + $0x1f4] sm:$0xf] %v2177
        %2434 = vst [vmem:[%s216 + $0x1f8] sm:$0xf] %v2178
        %2435 = vst [vmem:[%s216 + $0x1fc] sm:$0xf] %v2179
        %s2436 = sand.u32 %s97, 1
        %s2437 = scalar_lea.sflag [#allocation4], %s2436
        %s2438 = sand.u32 %s97, 1
        %s2439 = smul.addr %s2438, 512
        %s2440 = scalar_lea.vmem [#allocation8], %s2439
        // Predicated region
        $region45: #{tpu_custom_call.1} parent=31 // pred_check
          %p2441 = pneg %p107
        $region46: #{tpu_custom_call.1} parent=31 // pred_check_branch
          %2443 = sbr.rel (%p2441) target = $region48
        $region47: #{tpu_custom_call.1} parent=31 // pred_region
          %s2444 = smul.u32 128, %s21
          %s2446 = ssub.s32 8192, 8192
          %2447 = vsyncadd %s2437, %s2446
          %s2448 = smul.addr %s2444, 64
          %s2449 = scalar_lea.hbm %s3, %s2448
          %s2450 = sshll.u32 %s2440, 4
          %s2451 = int_to_ptr.vmem [resolvable:$true] %s2450
          %2456 = dma.vmem_to_hbm [thread:$0]  %s2451, 8192, %s2449, %s2437, 64, 64, 4
        $region48: #{tpu_custom_call.1} parent=31 // pred_fallthru
          _
      $region32: #{tpu_custom_call.1} parent=5 // pred_fallthru
        _
      %p2457 = scmp.le.s32.totalorder 2, %s16
      // Predicated region
      $region49: #{tpu_custom_call.1} parent=5 // pred_check
        %p2458 = pneg %p2457
      $region50: #{tpu_custom_call.1} parent=5 // pred_check_branch
        %2460 = sbr.rel (%p2458) target = $region52
      $region51: #{tpu_custom_call.1} parent=5 // pred_region
        %s2461 = ssub.s32 %s16, 2
        // Predicated region
        $region53: #{tpu_custom_call.1} parent=51 // pred_check
          %p2462 = pneg %p113
        $region54: #{tpu_custom_call.1} parent=51 // pred_check_branch
          %2464 = sbr.rel (%p2462) target = $region56
        $region55: #{tpu_custom_call.1} parent=51 // pred_region
          %s2465 = sand.u32 %s98, 1
          %s2466 = scalar_lea.sflag [#allocation4], %s2465
          %s2467 = sand.u32 %s98, 1
          %s2468 = smul.addr %s2467, 512
          %s2469 = scalar_lea.vmem [#allocation8], %s2468
          %2470 = dma.done %s2466, 8192
        $region56: #{tpu_custom_call.1} parent=51 // pred_fallthru
          _
      $region52: #{tpu_custom_call.1} parent=5 // pred_fallthru
        _
    $region6: #{tpu_custom_call.1} parent=1 // loop_footer
      %s20 = sadd.s32 1, %s16
    $region7: #{tpu_custom_call.1} parent=1 // loop_footer_branch
      %15 = sbr.rel target = $region3
    $region8: #{tpu_custom_call.1} parent=1 // loop_exit
      _
    %2471 = vsyncpa [#allocation3], 1
    %s2472 = scalar_lea.sflag [#allocation3], 1
    %2473 = vsyncpa %s2472, 1
    %2474 = vsyncpa [#allocation6], 1
    %2475 = vsyncpa [#allocation4], 1
    %s2476 = scalar_lea.sflag [#allocation4], 1
    %2477 = vsyncpa %s2476, 1

</llo_original>
